<compile_context>
chip_gen: v7x
topology: tpu7x:2x2x1
jax: 0.10.0
libtpu: 0.0.40
codegen_flags: <defaults>
</compile_context>

<pallas_src>
import numpy as np
import jax
import jax.numpy as jnp
from jax.experimental import pallas as pl
from jax.experimental.pallas import tpu as pltpu

# ----------------------------- model dims -----------------------------------
TEXT_DIM, PYT_DIM, AUDIO_DIM = 768, 300, 33
HID_T, HID_A, HID_P = 128, 64, 64            # hidden_size = [128, 64, 64]
TEXT_LINEAR, AUDIO_LINEAR = 128, 64
OUT_DIM = 6
BN_EPS = 1e-5

PA_DIM = PYT_DIM + AUDIO_DIM                 # 333  (pyT ++ audio input)
PA_PAD = 384                                 # padded to 3*128 lanes
PA_HID = HID_P + HID_A                       # 128  (pyT lanes 0:64, audio 64:128)

# ---- single bf16 weight slab, 128 lanes, row offsets (all multiples of 16) ----
T1_OFF = 0                                   # text W1 (BN folded)       768 rows
T2_OFF = T1_OFF + TEXT_DIM                   # text W2                   128
T3_OFF = T2_OFF + HID_T                      # text W3                   128
PA1_OFF = T3_OFF + HID_T                     # pa W1 (block-diag, pad)   384
PA2_OFF = PA1_OFF + PA_PAD                   # pa W2 (block-diag)        128
PA3_OFF = PA2_OFF + PA_HID                   # pa W3 (block-diag)        128
F1_OFF = PA3_OFF + PA_HID                    # PF1 merged (text|pyT|0)   256
F2_OFF = F1_OFF + 256                        # PF2 (out 6 -> 128 lanes)  128
F3_OFF = F2_OFF + TEXT_LINEAR                # PF3 merged (0|audio|t|0)  256
F4_OFF = F3_OFF + 256                        # PF4 (out -> lanes 64:70)  128
W_ROWS = F4_OFF + 128                        # 2432

NUM_BIAS = 10


# ------------------------------ kernel ---------------------------------------
def model_kernel(text_ref, pa_ref, w_ref, bias_ref, out_ref):
    f32, bf16 = jnp.float32, jnp.bfloat16

    def mm(x_bf16, off, rows):
        # bf16 x bf16 MXU matmul, f32 accumulation, static slab slice.
        return jnp.dot(x_bf16, w_ref[off:off + rows, :],
                       preferred_element_type=f32)

    def bias_relu(v, k):
        # pre-broadcast (B,128) bias -> plain vadd; keep activations bf16.
        return jnp.maximum(v + bias_ref[k], 0.0).astype(bf16)

    tx = text_ref[...]                                       # (B,768) bf16
    pax = pa_ref[...]                                        # (B,384) bf16

    # ---- text subnet (BN folded into layer 1; dropout = identity) ----
    h = bias_relu(mm(tx, T1_OFF, TEXT_DIM), 0)
    h = bias_relu(mm(h, T2_OFF, HID_T), 1)
    text_h = bias_relu(mm(h, T3_OFF, HID_T), 2)              # (B,128)

    # ---- pyT + audio subnets fused as block-diagonal matmuls ----
    # lanes 0:64 carry pyT_h, lanes 64:128 carry audio_h throughout.
    h = bias_relu(mm(pax, PA1_OFF, PA_PAD), 3)
    h = bias_relu(mm(h, PA2_OFF, PA_HID), 4)
    pa_h = bias_relu(mm(h, PA3_OFF, PA_HID), 5)              # (B,128)

    # ---- t_out = PF2( relu( PF1( cat(text_h, pyT_h) ) ) ) ----
    # single 256-K matmul; PF1 weight rows for the audio lanes are zero.
    fusion = jnp.concatenate([text_h, pa_h], axis=1)         # (B,256) bf16
    t_mid = bias_relu(mm(fusion, F1_OFF, 256), 6)            # (B,128)
    # PF2 weight occupies lanes 0:6 only -> t_out lanes 6:128 are exactly 0.
    t_out = mm(t_mid, F2_OFF, TEXT_LINEAR) + bias_ref[7]     # (B,128) f32

    # ---- a_out = PF4( relu( PF3( cat(audio_h, t_out) ) ) ) ----
    # single 256-K matmul; zero weight rows for the pyT lanes of pa_h and for
    # t_out lanes 6:128.  (t_out enters the MXU as bf16 -- within tolerance.)
    pf3_in = jnp.concatenate([pa_h, t_out.astype(bf16)], axis=1)   # (B,256)
    a_mid = bias_relu(mm(pf3_in, F3_OFF, 256), 8)            # (B,128), lanes 0:64 real
    # PF4 weight places a_out in lanes 64:70; all other lanes exactly 0.
    a_out = mm(a_mid, F4_OFF, 128) + bias_ref[9]             # (B,128) f32

    # t_out lives in lanes 0:6, a_out in lanes 64:70 -> one lane-dense store.
    out_ref[...] = t_out + a_out


# ------------------------------ raw params (PyTorch-like, f32) ----------------
def _linear_np(key, din, dout):
    k1, k2 = jax.random.split(key)
    bound = 1.0 / np.sqrt(din)
    w = np.asarray(jax.random.uniform(k1, (din, dout), jnp.float32, -bound, bound))
    b = np.asarray(jax.random.uniform(k2, (dout,), jnp.float32, -bound, bound))
    return w, b


def _bn_np(key, dim):
    k1, k2, k3, k4 = jax.random.split(key, 4)
    mean = np.asarray(0.1 * jax.random.normal(k1, (dim,), jnp.float32))
    var = np.asarray(jax.random.uniform(k2, (dim,), jnp.float32, 0.5, 1.5))
    gamma = np.asarray(jax.random.uniform(k3, (dim,), jnp.float32, 0.8, 1.2))
    beta = np.asarray(0.1 * jax.random.normal(k4, (dim,), jnp.float32))
    return mean, var, gamma, beta


def _subnet_np(key, din, dhid):
    kb, k1, k2, k3 = jax.random.split(key, 4)
    return dict(bn=_bn_np(kb, din),
                l1=_linear_np(k1, din, dhid),
                l2=_linear_np(k2, dhid, dhid),
                l3=_linear_np(k3, dhid, dhid))


def make_raw_params(key):
    ks = jax.random.split(key, 7)
    return dict(
        text=_subnet_np(ks[0], TEXT_DIM, HID_T),
        pyt=_subnet_np(ks[1], PYT_DIM, HID_P),
        audio=_subnet_np(ks[2], AUDIO_DIM, HID_A),
        pf1=_linear_np(ks[3], HID_T + HID_P, TEXT_LINEAR),
        pf2=_linear_np(ks[4], TEXT_LINEAR, OUT_DIM),
        pf3=_linear_np(ks[5], HID_A + OUT_DIM, AUDIO_LINEAR),
        pf4=_linear_np(ks[6], AUDIO_LINEAR, OUT_DIM),
    )


# ------------------------------ offline packing --------------------------------
def _fold_bn(bn, lin):
    mean, var, gamma, beta = bn
    w, b = lin
    scale = gamma / np.sqrt(var + BN_EPS)
    return (w * scale[:, None]).astype(np.float32), \
           (b + (beta - mean * scale) @ w).astype(np.float32)


def pack_params(raw, batch):
    tW1, tb1 = _fold_bn(raw['text']['bn'], raw['text']['l1'])
    pW1, pb1 = _fold_bn(raw['pyt']['bn'], raw['pyt']['l1'])
    aW1, ab1 = _fold_bn(raw['audio']['bn'], raw['audio']['l1'])
    tW2, tb2 = raw['text']['l2']
    tW3, tb3 = raw['text']['l3']
    pW2, pb2 = raw['pyt']['l2']
    pW3, pb3 = raw['pyt']['l3']
    aW2, ab2 = raw['audio']['l2']
    aW3, ab3 = raw['audio']['l3']
    pf1_w, pf1_b = raw['pf1']
    pf2_w, pf2_b = raw['pf2']
    pf3_w, pf3_b = raw['pf3']
    pf4_w, pf4_b = raw['pf4']

    W = np.zeros((W_ROWS, 128), np.float32)

    # text subnet
    W[T1_OFF:T1_OFF + TEXT_DIM, :] = tW1
    W[T2_OFF:T2_OFF + HID_T, :] = tW2
    W[T3_OFF:T3_OFF + HID_T, :] = tW3

    # pyT/audio subnets fused into one block-diagonal "pa" subnet
    W[PA1_OFF:PA1_OFF + PYT_DIM, :HID_P] = pW1
    W[PA1_OFF + PYT_DIM:PA1_OFF + PA_DIM, HID_P:] = aW1
    W[PA2_OFF:PA2_OFF + HID_P, :HID_P] = pW2
    W[PA2_OFF + HID_P:PA2_OFF + PA_HID, HID_P:] = aW2
    W[PA3_OFF:PA3_OFF + HID_P, :HID_P] = pW3
    W[PA3_OFF + HID_P:PA3_OFF + PA_HID, HID_P:] = aW3

    # PF1 merged: rows 0:128 text half, 128:192 pyT half, 192:256 zero (audio lanes)
    W[F1_OFF:F1_OFF + HID_T, :] = pf1_w[:HID_T]
    W[F1_OFF + HID_T:F1_OFF + HID_T + HID_P, :] = pf1_w[HID_T:]

    # PF2: real output in lanes 0:6
    W[F2_OFF:F2_OFF + TEXT_LINEAR, :OUT_DIM] = pf2_w

    # PF3 merged: rows 0:64 zero (pyT lanes), 64:128 audio half, 128:134 t_out half
    W[F3_OFF + HID_P:F3_OFF + PA_HID, :AUDIO_LINEAR] = pf3_w[:HID_A]
    W[F3_OFF + PA_HID:F3_OFF + PA_HID + OUT_DIM, :AUDIO_LINEAR] = pf3_w[HID_A:]

    # PF4: real rows 0:64, output placed directly in lanes 64:70
    W[F4_OFF:F4_OFF + AUDIO_LINEAR, 64:64 + OUT_DIM] = pf4_w

    bias = np.zeros((NUM_BIAS, 128), np.float32)
    bias[0], bias[1], bias[2] = tb1, tb2, tb3
    bias[3] = np.concatenate([pb1, ab1])
    bias[4] = np.concatenate([pb2, ab2])
    bias[5] = np.concatenate([pb3, ab3])
    bias[6] = pf1_b
    bias[7, :OUT_DIM] = pf2_b
    bias[8, :AUDIO_LINEAR] = pf3_b
    bias[9, 64:64 + OUT_DIM] = pf4_b
    # pre-broadcast across the batch sublanes -> no in-kernel XLU broadcast
    bias_b = np.ascontiguousarray(
        np.broadcast_to(bias[:, None, :], (NUM_BIAS, batch, 128)))

    return jnp.asarray(W, jnp.bfloat16), jnp.asarray(bias_b, jnp.float32)


# ------------------------------ wrapper ---------------------------------------
@jax.jit
def model_forward(text_x, audio_x, pyt_x, w, bias):
    # .squeeze() of the singleton "seq" dim (glue); feed the MXU bf16 directly.
    text_x = text_x.reshape(text_x.shape[0], -1).astype(jnp.bfloat16)
    audio_x = audio_x.reshape(audio_x.shape[0], -1).astype(jnp.bfloat16)
    pyt_x = pyt_x.reshape(pyt_x.shape[0], -1).astype(jnp.bfloat16)
    B = text_x.shape[0]

    # pyT ++ audio ++ zero-pad -> single 384-lane input for the fused "pa" subnet
    pa_x = jnp.concatenate(
        [pyt_x, audio_x, jnp.zeros((B, PA_PAD - PA_DIM), jnp.bfloat16)], axis=1)

    mm_dims = [(TEXT_DIM, 128), (HID_T, 128), (HID_T, 128),
               (PA_PAD, 128), (PA_HID, 128), (PA_HID, 128),
               (256, 128), (TEXT_LINEAR, 128), (256, 128), (128, 128)]
    flops = 2 * B * sum(k * n for k, n in mm_dims)
    bytes_accessed = (text_x.size * 2 + pa_x.size * 2
                      + W_ROWS * 128 * 2 + NUM_BIAS * B * 128 * 4 + B * 128 * 4)

    vmem = pl.BlockSpec(memory_space=pltpu.MemorySpace.VMEM)
    out = pl.pallas_call(
        model_kernel,
        out_shape=jax.ShapeDtypeStruct((B, 128), jnp.float32),
        in_specs=[vmem] * 4,
        out_specs=vmem,
        cost_estimate=pl.CostEstimate(flops=flops, transcendentals=0,
                                      bytes_accessed=bytes_accessed),
    )(text_x, pa_x, w, bias)

    # t_out in lanes 0:6, a_out in lanes 64:70
    return out[:, :OUT_DIM], out[:, 64:64 + OUT_DIM]


# ------------------------------ reference (f64, original module semantics) ----
def reference_forward(text_x, audio_x, pyt_x, raw):
    text_x = np.asarray(text_x, np.float64).reshape(text_x.shape[0], -1)
    audio_x = np.asarray(audio_x, np.float64).reshape(audio_x.shape[0], -1)
    pyt_x = np.asarray(pyt_x, np.float64).reshape(pyt_x.shape[0], -1)

    def subnet(x, p):
        mean, var, gamma, beta = p['bn']
        xn = (x - mean) * gamma / np.sqrt(var + BN_EPS) + beta
        y = np.maximum(xn @ p['l1'][0] + p['l1'][1], 0.0)
        y = np.maximum(y @ p['l2'][0] + p['l2'][1], 0.0)
        y = np.maximum(y @ p['l3'][0] + p['l3'][1], 0.0)
        return y

    text_h = subnet(text_x, raw['text'])
    pyt_h = subnet(pyt_x, raw['pyt'])
    fusion = np.concatenate([text_h, pyt_h], axis=1)
    t_mid = np.maximum(fusion @ raw['pf1'][0] + raw['pf1'][1], 0.0)
    t_out = t_mid @ raw['pf2'][0] + raw['pf2'][1]

    audio_h = subnet(audio_x, raw['audio'])
    inp = np.concatenate([audio_h, t_out], axis=1)
    a_mid = np.maximum(inp @ raw['pf3'][0] + raw['pf3'][1], 0.0)
    a_out = a_mid @ raw['pf4'][0] + raw['pf4'][1]
    return t_out, a_out


# ------------------------------ main -------------------------------------------
if __name__ == "__main__":
    key = jax.random.PRNGKey(0)
    k_param, k_t, k_a, k_p = jax.random.split(key, 4)

    B = 8
    # inputs carry a singleton middle dim, matching the module's .squeeze()
    text_x = jax.random.normal(k_t, (B, 1, TEXT_DIM), jnp.float32)
    audio_x = jax.random.normal(k_a, (B, 1, AUDIO_DIM), jnp.float32)
    pyt_x = jax.random.normal(k_p, (B, 1, PYT_DIM), jnp.float32)

    raw = make_raw_params(k_param)
    w_slab, bias_slab = pack_params(raw, B)

    t_out, a_out = model_forward(text_x, audio_x, pyt_x, w_slab, bias_slab)
    jax.block_until_ready((t_out, a_out))

    t_ref, a_ref = reference_forward(text_x, audio_x, pyt_x, raw)
    assert t_out.shape == (B, OUT_DIM) and a_out.shape == (B, OUT_DIM)
    # tolerance widened vs f64 reference to account for bf16 weights/activations
    np.testing.assert_allclose(np.asarray(t_out), t_ref, rtol=2e-2, atol=2e-2)
    np.testing.assert_allclose(np.asarray(a_out), a_ref, rtol=2e-2, atol=2e-2)

    print("KERNEL_OK")
</pallas_src>

<mosaic_0001>
module attributes {stable_mosaic.version = 11 : i64} {
  func.func @model_kernel(%arg0: memref<8x768xbf16, #tpu.memory_space<vmem>>, %arg1: memref<8x384xbf16, #tpu.memory_space<vmem>>, %arg2: memref<2432x128xbf16, #tpu.memory_space<vmem>>, %arg3: memref<10x8x128xf32, #tpu.memory_space<vmem>>, %arg4: memref<8x128xf32, #tpu.memory_space<vmem>>) attributes {dimension_semantics = [], scalar_prefetch = 0 : i64, scratch_operands = 0 : i64, tpu.core_type = #tpu.core_type<tc>} {
    %c0 = arith.constant 0 : index
    %c0_0 = arith.constant 0 : index
    %0 = vector.load %arg0[%c0, %c0_0] : memref<8x768xbf16, #tpu.memory_space<vmem>>, vector<8x768xbf16>
    %c0_1 = arith.constant 0 : index
    %c0_2 = arith.constant 0 : index
    %1 = vector.load %arg1[%c0_1, %c0_2] : memref<8x384xbf16, #tpu.memory_space<vmem>>, vector<8x384xbf16>
    %c0_3 = arith.constant 0 : index
    %c0_4 = arith.constant 0 : index
    %2 = vector.load %arg2[%c0_3, %c0_4] : memref<2432x128xbf16, #tpu.memory_space<vmem>>, vector<768x128xbf16>
    %cst = arith.constant dense<0.000000e+00> : vector<8x128xf32>
    %3 = tpu.matmul %0, %2, %cst {dimension_numbers = #tpu.dot_dimension_numbers<[1], [0], [0], [1], [0, 0, 1, 1], [], []>} : vector<8x768xbf16>, vector<768x128xbf16>, vector<8x128xf32> -> vector<8x128xf32>
    %c0_5 = arith.constant 0 : index
    %c0_6 = arith.constant 0 : index
    %c0_7 = arith.constant 0 : index
    %4 = vector.load %arg3[%c0_5, %c0_6, %c0_7] : memref<10x8x128xf32, #tpu.memory_space<vmem>>, vector<1x8x128xf32>
    %5 = vector.shape_cast %4 : vector<1x8x128xf32> to vector<8x128xf32>
    %6 = arith.addf %3, %5 : vector<8x128xf32>
    %cst_8 = arith.constant 0.000000e+00 : f32
    %7 = vector.broadcast %cst_8 : f32 to vector<8x128xf32>
    %8 = arith.maximumf %6, %7 : vector<8x128xf32>
    %9 = arith.truncf %8 : vector<8x128xf32> to vector<8x128xbf16>
    %c768 = arith.constant 768 : index
    %c0_9 = arith.constant 0 : index
    %10 = vector.load %arg2[%c768, %c0_9] : memref<2432x128xbf16, #tpu.memory_space<vmem>>, vector<128x128xbf16>
    %cst_10 = arith.constant dense<0.000000e+00> : vector<8x128xf32>
    %11 = tpu.matmul %9, %10, %cst_10 {dimension_numbers = #tpu.dot_dimension_numbers<[1], [0], [0], [1], [0, 0, 1, 1], [], []>} : vector<8x128xbf16>, vector<128x128xbf16>, vector<8x128xf32> -> vector<8x128xf32>
    %c1 = arith.constant 1 : index
    %c0_11 = arith.constant 0 : index
    %c0_12 = arith.constant 0 : index
    %12 = vector.load %arg3[%c1, %c0_11, %c0_12] : memref<10x8x128xf32, #tpu.memory_space<vmem>>, vector<1x8x128xf32>
    %13 = vector.shape_cast %12 : vector<1x8x128xf32> to vector<8x128xf32>
    %14 = arith.addf %11, %13 : vector<8x128xf32>
    %cst_13 = arith.constant 0.000000e+00 : f32
    %15 = vector.broadcast %cst_13 : f32 to vector<8x128xf32>
    %16 = arith.maximumf %14, %15 : vector<8x128xf32>
    %17 = arith.truncf %16 : vector<8x128xf32> to vector<8x128xbf16>
    %c896 = arith.constant 896 : index
    %c0_14 = arith.constant 0 : index
    %18 = vector.load %arg2[%c896, %c0_14] : memref<2432x128xbf16, #tpu.memory_space<vmem>>, vector<128x128xbf16>
    %cst_15 = arith.constant dense<0.000000e+00> : vector<8x128xf32>
    %19 = tpu.matmul %17, %18, %cst_15 {dimension_numbers = #tpu.dot_dimension_numbers<[1], [0], [0], [1], [0, 0, 1, 1], [], []>} : vector<8x128xbf16>, vector<128x128xbf16>, vector<8x128xf32> -> vector<8x128xf32>
    %c2 = arith.constant 2 : index
    %c0_16 = arith.constant 0 : index
    %c0_17 = arith.constant 0 : index
    %20 = vector.load %arg3[%c2, %c0_16, %c0_17] : memref<10x8x128xf32, #tpu.memory_space<vmem>>, vector<1x8x128xf32>
    %21 = vector.shape_cast %20 : vector<1x8x128xf32> to vector<8x128xf32>
    %22 = arith.addf %19, %21 : vector<8x128xf32>
    %cst_18 = arith.constant 0.000000e+00 : f32
    %23 = vector.broadcast %cst_18 : f32 to vector<8x128xf32>
    %24 = arith.maximumf %22, %23 : vector<8x128xf32>
    %25 = arith.truncf %24 : vector<8x128xf32> to vector<8x128xbf16>
    %c1024 = arith.constant 1024 : index
    %c0_19 = arith.constant 0 : index
    %26 = vector.load %arg2[%c1024, %c0_19] : memref<2432x128xbf16, #tpu.memory_space<vmem>>, vector<384x128xbf16>
    %cst_20 = arith.constant dense<0.000000e+00> : vector<8x128xf32>
    %27 = tpu.matmul %1, %26, %cst_20 {dimension_numbers = #tpu.dot_dimension_numbers<[1], [0], [0], [1], [0, 0, 1, 1], [], []>} : vector<8x384xbf16>, vector<384x128xbf16>, vector<8x128xf32> -> vector<8x128xf32>
    %c3 = arith.constant 3 : index
    %c0_21 = arith.constant 0 : index
    %c0_22 = arith.constant 0 : index
    %28 = vector.load %arg3[%c3, %c0_21, %c0_22] : memref<10x8x128xf32, #tpu.memory_space<vmem>>, vector<1x8x128xf32>
    %29 = vector.shape_cast %28 : vector<1x8x128xf32> to vector<8x128xf32>
    %30 = arith.addf %27, %29 : vector<8x128xf32>
    %cst_23 = arith.constant 0.000000e+00 : f32
    %31 = vector.broadcast %cst_23 : f32 to vector<8x128xf32>
    %32 = arith.maximumf %30, %31 : vector<8x128xf32>
    %33 = arith.truncf %32 : vector<8x128xf32> to vector<8x128xbf16>
    %c1408 = arith.constant 1408 : index
    %c0_24 = arith.constant 0 : index
    %34 = vector.load %arg2[%c1408, %c0_24] : memref<2432x128xbf16, #tpu.memory_space<vmem>>, vector<128x128xbf16>
    %cst_25 = arith.constant dense<0.000000e+00> : vector<8x128xf32>
    %35 = tpu.matmul %33, %34, %cst_25 {dimension_numbers = #tpu.dot_dimension_numbers<[1], [0], [0], [1], [0, 0, 1, 1], [], []>} : vector<8x128xbf16>, vector<128x128xbf16>, vector<8x128xf32> -> vector<8x128xf32>
    %c4 = arith.constant 4 : index
    %c0_26 = arith.constant 0 : index
    %c0_27 = arith.constant 0 : index
    %36 = vector.load %arg3[%c4, %c0_26, %c0_27] : memref<10x8x128xf32, #tpu.memory_space<vmem>>, vector<1x8x128xf32>
    %37 = vector.shape_cast %36 : vector<1x8x128xf32> to vector<8x128xf32>
    %38 = arith.addf %35, %37 : vector<8x128xf32>
    %cst_28 = arith.constant 0.000000e+00 : f32
    %39 = vector.broadcast %cst_28 : f32 to vector<8x128xf32>
    %40 = arith.maximumf %38, %39 : vector<8x128xf32>
    %41 = arith.truncf %40 : vector<8x128xf32> to vector<8x128xbf16>
    %c1536 = arith.constant 1536 : index
    %c0_29 = arith.constant 0 : index
    %42 = vector.load %arg2[%c1536, %c0_29] : memref<2432x128xbf16, #tpu.memory_space<vmem>>, vector<128x128xbf16>
    %cst_30 = arith.constant dense<0.000000e+00> : vector<8x128xf32>
    %43 = tpu.matmul %41, %42, %cst_30 {dimension_numbers = #tpu.dot_dimension_numbers<[1], [0], [0], [1], [0, 0, 1, 1], [], []>} : vector<8x128xbf16>, vector<128x128xbf16>, vector<8x128xf32> -> vector<8x128xf32>
    %c5 = arith.constant 5 : index
    %c0_31 = arith.constant 0 : index
    %c0_32 = arith.constant 0 : index
    %44 = vector.load %arg3[%c5, %c0_31, %c0_32] : memref<10x8x128xf32, #tpu.memory_space<vmem>>, vector<1x8x128xf32>
    %45 = vector.shape_cast %44 : vector<1x8x128xf32> to vector<8x128xf32>
    %46 = arith.addf %43, %45 : vector<8x128xf32>
    %cst_33 = arith.constant 0.000000e+00 : f32
    %47 = vector.broadcast %cst_33 : f32 to vector<8x128xf32>
    %48 = arith.maximumf %46, %47 : vector<8x128xf32>
    %49 = arith.truncf %48 : vector<8x128xf32> to vector<8x128xbf16>
    %50 = tpu.concatenate %25, %49 in 1 : vector<8x128xbf16>, vector<8x128xbf16> -> vector<8x256xbf16>
    %c1664 = arith.constant 1664 : index
    %c0_34 = arith.constant 0 : index
    %51 = vector.load %arg2[%c1664, %c0_34] : memref<2432x128xbf16, #tpu.memory_space<vmem>>, vector<256x128xbf16>
    %cst_35 = arith.constant dense<0.000000e+00> : vector<8x128xf32>
    %52 = tpu.matmul %50, %51, %cst_35 {dimension_numbers = #tpu.dot_dimension_numbers<[1], [0], [0], [1], [0, 0, 1, 1], [], []>} : vector<8x256xbf16>, vector<256x128xbf16>, vector<8x128xf32> -> vector<8x128xf32>
    %c6 = arith.constant 6 : index
    %c0_36 = arith.constant 0 : index
    %c0_37 = arith.constant 0 : index
    %53 = vector.load %arg3[%c6, %c0_36, %c0_37] : memref<10x8x128xf32, #tpu.memory_space<vmem>>, vector<1x8x128xf32>
    %54 = vector.shape_cast %53 : vector<1x8x128xf32> to vector<8x128xf32>
    %55 = arith.addf %52, %54 : vector<8x128xf32>
    %cst_38 = arith.constant 0.000000e+00 : f32
    %56 = vector.broadcast %cst_38 : f32 to vector<8x128xf32>
    %57 = arith.maximumf %55, %56 : vector<8x128xf32>
    %58 = arith.truncf %57 : vector<8x128xf32> to vector<8x128xbf16>
    %c1920 = arith.constant 1920 : index
    %c0_39 = arith.constant 0 : index
    %59 = vector.load %arg2[%c1920, %c0_39] : memref<2432x128xbf16, #tpu.memory_space<vmem>>, vector<128x128xbf16>
    %cst_40 = arith.constant dense<0.000000e+00> : vector<8x128xf32>
    %60 = tpu.matmul %58, %59, %cst_40 {dimension_numbers = #tpu.dot_dimension_numbers<[1], [0], [0], [1], [0, 0, 1, 1], [], []>} : vector<8x128xbf16>, vector<128x128xbf16>, vector<8x128xf32> -> vector<8x128xf32>
    %c7 = arith.constant 7 : index
    %c0_41 = arith.constant 0 : index
    %c0_42 = arith.constant 0 : index
    %61 = vector.load %arg3[%c7, %c0_41, %c0_42] : memref<10x8x128xf32, #tpu.memory_space<vmem>>, vector<1x8x128xf32>
    %62 = vector.shape_cast %61 : vector<1x8x128xf32> to vector<8x128xf32>
    %63 = arith.addf %60, %62 : vector<8x128xf32>
    %64 = arith.truncf %63 : vector<8x128xf32> to vector<8x128xbf16>
    %65 = tpu.concatenate %49, %64 in 1 : vector<8x128xbf16>, vector<8x128xbf16> -> vector<8x256xbf16>
    %c2048 = arith.constant 2048 : index
    %c0_43 = arith.constant 0 : index
    %66 = vector.load %arg2[%c2048, %c0_43] : memref<2432x128xbf16, #tpu.memory_space<vmem>>, vector<256x128xbf16>
    %cst_44 = arith.constant dense<0.000000e+00> : vector<8x128xf32>
    %67 = tpu.matmul %65, %66, %cst_44 {dimension_numbers = #tpu.dot_dimension_numbers<[1], [0], [0], [1], [0, 0, 1, 1], [], []>} : vector<8x256xbf16>, vector<256x128xbf16>, vector<8x128xf32> -> vector<8x128xf32>
    %c8 = arith.constant 8 : index
    %c0_45 = arith.constant 0 : index
    %c0_46 = arith.constant 0 : index
    %68 = vector.load %arg3[%c8, %c0_45, %c0_46] : memref<10x8x128xf32, #tpu.memory_space<vmem>>, vector<1x8x128xf32>
    %69 = vector.shape_cast %68 : vector<1x8x128xf32> to vector<8x128xf32>
    %70 = arith.addf %67, %69 : vector<8x128xf32>
    %cst_47 = arith.constant 0.000000e+00 : f32
    %71 = vector.broadcast %cst_47 : f32 to vector<8x128xf32>
    %72 = arith.maximumf %70, %71 : vector<8x128xf32>
    %73 = arith.truncf %72 : vector<8x128xf32> to vector<8x128xbf16>
    %c2304 = arith.constant 2304 : index
    %c0_48 = arith.constant 0 : index
    %74 = vector.load %arg2[%c2304, %c0_48] : memref<2432x128xbf16, #tpu.memory_space<vmem>>, vector<128x128xbf16>
    %cst_49 = arith.constant dense<0.000000e+00> : vector<8x128xf32>
    %75 = tpu.matmul %73, %74, %cst_49 {dimension_numbers = #tpu.dot_dimension_numbers<[1], [0], [0], [1], [0, 0, 1, 1], [], []>} : vector<8x128xbf16>, vector<128x128xbf16>, vector<8x128xf32> -> vector<8x128xf32>
    %c9 = arith.constant 9 : index
    %c0_50 = arith.constant 0 : index
    %c0_51 = arith.constant 0 : index
    %76 = vector.load %arg3[%c9, %c0_50, %c0_51] : memref<10x8x128xf32, #tpu.memory_space<vmem>>, vector<1x8x128xf32>
    %77 = vector.shape_cast %76 : vector<1x8x128xf32> to vector<8x128xf32>
    %78 = arith.addf %75, %77 : vector<8x128xf32>
    %79 = arith.addf %63, %78 : vector<8x128xf32>
    %c0_52 = arith.constant 0 : index
    %c0_53 = arith.constant 0 : index
    %80 = vector.load %arg4[%c0_52, %c0_53] : memref<8x128xf32, #tpu.memory_space<vmem>>, vector<8x128xf32>
    tpu.vector_store %arg4[%c0_52, %c0_53], %79 {strides = array<i32>} : memref<8x128xf32, #tpu.memory_space<vmem>>, vector<8x128xf32>,
    return
  }
}

</mosaic_0001>

<llo_original>
// kernel: model_forward.1
$region0: #{model_forward.1}
  #allocation0 [shape = 'u32[]', space=smem, size = 0x4, offset = 0x4, fixed_abs, tag = 'smem constant byte address 0x4 - core index']
  #allocation1 [shape = 'u32[144,128]{1,0:T(1,128)}', space=vmem, size = 0x12000, scoped, tag = 'internal scratch']
  %s0 = inlined_call_operand.vmem [shape: bf16[8,768], index: 0, kind: input, shape index: {}]
  %s1 = inlined_call_operand.vmem [shape: bf16[8,384], index: 1, kind: input, shape index: {}]
  %s2 = inlined_call_operand.hbm [shape: bf16[2432,128], index: 2, kind: input, shape index: {}]
  %s3 = inlined_call_operand.vmem [shape: f32[10,8,128], index: 3, kind: input, shape index: {}]
  %s4 = inlined_call_operand.vmem [shape: f32[8,128], index: 4, kind: output, shape index: {}]
  %s5 = sld [smem:[#allocation0]]
  $region30: #{model_forward.1} parent=0
    _
  %s7 = ssub.s32 1, %s5
  %s8 = scalar_select 0, %s7, %s5
  $region1: #{model_forward.1} parent=0
    #allocation2 [shape = 'u8[622592]{0}', space=vmem, size = 0x98000, scoped, tag = 'input window, operand 2, single buffered']
    #allocation3 [shape = 's32[1]{0}', space=sflag, size = 0x4, scoped, tag = 'scoped memory for model_forward.1']
    %9 = vsyncpa [#allocation3], 0
    // Predicated region
    $region2: #{model_forward.1} parent=1 // pred_check
      _
    $region3: #{model_forward.1} parent=1 // pred_check_branch
      %11 = sbr.rel (0) target = $region5
    $region4: #{model_forward.1} parent=1 // pred_region
      _
    $region5: #{model_forward.1} parent=1 // pred_fallthru
      _
    // Predicated region
    $region6: #{model_forward.1} parent=1 // pred_check
      _
    $region7: #{model_forward.1} parent=1 // pred_check_branch
      %13 = sbr.rel (0) target = $region9
    $region8: #{model_forward.1} parent=1 // pred_region
      _
    $region9: #{model_forward.1} parent=1 // pred_fallthru
      _
    // Predicated region
    $region10: #{model_forward.1} parent=1 // pred_check
      _
    $region11: #{model_forward.1} parent=1 // pred_check_branch
      %15 = sbr.rel (0) target = $region13
    $region12: #{model_forward.1} parent=1 // pred_region
      %s17 = ssub.s32 19456, 19456
      %18 = vsyncadd [#allocation3], %s17
      %s19 = sshll.u32 [#allocation2], 4
      %s20 = int_to_ptr.vmem [resolvable:$true] %s19
      %25 = dma.hbm_to_vmem [thread:$0]  %s2, 19456, %s20, [#allocation3], 64, 64, 4
    $region13: #{model_forward.1} parent=1 // pred_fallthru
      _
    // Predicated region
    $region14: #{model_forward.1} parent=1 // pred_check
      _
    $region15: #{model_forward.1} parent=1 // pred_check_branch
      %27 = sbr.rel (0) target = $region17
    $region16: #{model_forward.1} parent=1 // pred_region
      _
    $region17: #{model_forward.1} parent=1 // pred_fallthru
      _
    // Predicated region
    $region18: #{model_forward.1} parent=1 // pred_check
      _
    $region19: #{model_forward.1} parent=1 // pred_check_branch
      %29 = sbr.rel (0) target = $region21
    $region20: #{model_forward.1} parent=1 // pred_region
      %30 = dma.done [#allocation3], 19456
    $region21: #{model_forward.1} parent=1 // pred_fallthru
      _
    %v32 = vld [vmem:[%s0] sm:$0xff]
    %v33 = vld [vmem:[%s0 + $0x8] sm:$0xff]
    %v34 = vld [vmem:[%s0 + $0x10] sm:$0xff]
    %v35 = vld [vmem:[%s1] sm:$0xff]
    %v36 = vld [vmem:[%s1 + $0x8] sm:$0xf]
    %v37 = vld [vmem:[#allocation2] sm:$0xf]
    %v38 = vld [vmem:[#allocation2 + $0x4] sm:$0xf]
    %v39 = vld [vmem:[#allocation2 + $0x8] sm:$0xf]
    %v40 = vld [vmem:[#allocation2 + $0xc] sm:$0xf]
    %v41 = vld [vmem:[#allocation2 + $0x10] sm:$0xf]
    %v42 = vld [vmem:[#allocation2 + $0x14] sm:$0xf]
    %v43 = vld [vmem:[#allocation2 + $0x18] sm:$0xf]
    %v44 = vld [vmem:[#allocation2 + $0x1c] sm:$0xf]
    %v45 = vld [vmem:[#allocation2 + $0x20] sm:$0xf]
    %v46 = vld [vmem:[#allocation2 + $0x24] sm:$0xf]
    %v47 = vld [vmem:[#allocation2 + $0x28] sm:$0xf]
    %v48 = vld [vmem:[#allocation2 + $0x2c] sm:$0xf]
    %v49 = vld [vmem:[#allocation2 + $0x30] sm:$0xf]
    %v50 = vld [vmem:[#allocation2 + $0x34] sm:$0xf]
    %v51 = vld [vmem:[#allocation2 + $0x38] sm:$0xf]
    %v52 = vld [vmem:[#allocation2 + $0x3c] sm:$0xf]
    %v53 = vld [vmem:[#allocation2 + $0x40] sm:$0xf]
    %v54 = vld [vmem:[#allocation2 + $0x44] sm:$0xf]
    %v55 = vld [vmem:[#allocation2 + $0x48] sm:$0xf]
    %v56 = vld [vmem:[#allocation2 + $0x4c] sm:$0xf]
    %v57 = vld [vmem:[#allocation2 + $0x50] sm:$0xf]
    %v58 = vld [vmem:[#allocation2 + $0x54] sm:$0xf]
    %v59 = vld [vmem:[#allocation2 + $0x58] sm:$0xf]
    %v60 = vld [vmem:[#allocation2 + $0x5c] sm:$0xf]
    %v61 = vld [vmem:[#allocation2 + $0x60] sm:$0xf]
    %v62 = vld [vmem:[#allocation2 + $0x64] sm:$0xf]
    %v63 = vld [vmem:[#allocation2 + $0x68] sm:$0xf]
    %v64 = vld [vmem:[#allocation2 + $0x6c] sm:$0xf]
    %v65 = vld [vmem:[#allocation2 + $0x70] sm:$0xf]
    %v66 = vld [vmem:[#allocation2 + $0x74] sm:$0xf]
    %v67 = vld [vmem:[#allocation2 + $0x78] sm:$0xf]
    %v68 = vld [vmem:[#allocation2 + $0x7c] sm:$0xf]
    %v69 = vld [vmem:[#allocation2 + $0x80] sm:$0xf]
    %v70 = vld [vmem:[#allocation2 + $0x84] sm:$0xf]
    %v71 = vld [vmem:[#allocation2 + $0x88] sm:$0xf]
    %v72 = vld [vmem:[#allocation2 + $0x8c] sm:$0xf]
    %v73 = vld [vmem:[#allocation2 + $0x90] sm:$0xf]
    %v74 = vld [vmem:[#allocation2 + $0x94] sm:$0xf]
    %v75 = vld [vmem:[#allocation2 + $0x98] sm:$0xf]
    %v76 = vld [vmem:[#allocation2 + $0x9c] sm:$0xf]
    %v77 = vld [vmem:[#allocation2 + $0xa0] sm:$0xf]
    %v78 = vld [vmem:[#allocation2 + $0xa4] sm:$0xf]
    %v79 = vld [vmem:[#allocation2 + $0xa8] sm:$0xf]
    %v80 = vld [vmem:[#allocation2 + $0xac] sm:$0xf]
    %v81 = vld [vmem:[#allocation2 + $0xb0] sm:$0xf]
    %v82 = vld [vmem:[#allocation2 + $0xb4] sm:$0xf]
    %v83 = vld [vmem:[#allocation2 + $0xb8] sm:$0xf]
    %v84 = vld [vmem:[#allocation2 + $0xbc] sm:$0xf]
    %v85 = vld [vmem:[#allocation2 + $0xc0] sm:$0xf]
    %v86 = vld [vmem:[#allocation2 + $0xc4] sm:$0xf]
    %v87 = vld [vmem:[#allocation2 + $0xc8] sm:$0xf]
    %v88 = vld [vmem:[#allocation2 + $0xcc] sm:$0xf]
    %v89 = vld [vmem:[#allocation2 + $0xd0] sm:$0xf]
    %v90 = vld [vmem:[#allocation2 + $0xd4] sm:$0xf]
    %v91 = vld [vmem:[#allocation2 + $0xd8] sm:$0xf]
    %v92 = vld [vmem:[#allocation2 + $0xdc] sm:$0xf]
    %v93 = vld [vmem:[#allocation2 + $0xe0] sm:$0xf]
    %v94 = vld [vmem:[#allocation2 + $0xe4] sm:$0xf]
    %v95 = vld [vmem:[#allocation2 + $0xe8] sm:$0xf]
    %v96 = vld [vmem:[#allocation2 + $0xec] sm:$0xf]
    %v97 = vld [vmem:[#allocation2 + $0xf0] sm:$0xf]
    %v98 = vld [vmem:[#allocation2 + $0xf4] sm:$0xf]
    %v99 = vld [vmem:[#allocation2 + $0xf8] sm:$0xf]
    %v100 = vld [vmem:[#allocation2 + $0xfc] sm:$0xf]
    %v101 = vld [vmem:[#allocation2 + $0x100] sm:$0xf]
    %v102 = vld [vmem:[#allocation2 + $0x104] sm:$0xf]
    %v103 = vld [vmem:[#allocation2 + $0x108] sm:$0xf]
    %v104 = vld [vmem:[#allocation2 + $0x10c] sm:$0xf]
    %v105 = vld [vmem:[#allocation2 + $0x110] sm:$0xf]
    %v106 = vld [vmem:[#allocation2 + $0x114] sm:$0xf]
    %v107 = vld [vmem:[#allocation2 + $0x118] sm:$0xf]
    %v108 = vld [vmem:[#allocation2 + $0x11c] sm:$0xf]
    %v109 = vld [vmem:[#allocation2 + $0x120] sm:$0xf]
    %v110 = vld [vmem:[#allocation2 + $0x124] sm:$0xf]
    %v111 = vld [vmem:[#allocation2 + $0x128] sm:$0xf]
    %v112 = vld [vmem:[#allocation2 + $0x12c] sm:$0xf]
    %v113 = vld [vmem:[#allocation2 + $0x130] sm:$0xf]
    %v114 = vld [vmem:[#allocation2 + $0x134] sm:$0xf]
    %v115 = vld [vmem:[#allocation2 + $0x138] sm:$0xf]
    %v116 = vld [vmem:[#allocation2 + $0x13c] sm:$0xf]
    %v117 = vld [vmem:[#allocation2 + $0x140] sm:$0xf]
    %v118 = vld [vmem:[#allocation2 + $0x144] sm:$0xf]
    %v119 = vld [vmem:[#allocation2 + $0x148] sm:$0xf]
    %v120 = vld [vmem:[#allocation2 + $0x14c] sm:$0xf]
    %v121 = vld [vmem:[#allocation2 + $0x150] sm:$0xf]
    %v122 = vld [vmem:[#allocation2 + $0x154] sm:$0xf]
    %v123 = vld [vmem:[#allocation2 + $0x158] sm:$0xf]
    %v124 = vld [vmem:[#allocation2 + $0x15c] sm:$0xf]
    %v125 = vld [vmem:[#allocation2 + $0x160] sm:$0xf]
    %v126 = vld [vmem:[#allocation2 + $0x164] sm:$0xf]
    %v127 = vld [vmem:[#allocation2 + $0x168] sm:$0xf]
    %v128 = vld [vmem:[#allocation2 + $0x16c] sm:$0xf]
    %v129 = vld [vmem:[#allocation2 + $0x170] sm:$0xf]
    %v130 = vld [vmem:[#allocation2 + $0x174] sm:$0xf]
    %v131 = vld [vmem:[#allocation2 + $0x178] sm:$0xf]
    %v132 = vld [vmem:[#allocation2 + $0x17c] sm:$0xf]
    %v133 = vld [vmem:[%s3] sm:$0xff]
    %v137 = vunpack.c.l.b16 %v32
    %v138 = vunpack.c.h.b16 %v32
    %v139 = vunpack.c.l.b16 %v33
    %v140 = vunpack.c.h.b16 %v33
    %v141 = vunpack.c.l.b16 %v34
    %v142 = vunpack.c.h.b16 %v34
    %v143 = vpack.c.b16 %v137, %v137
    %v144 = vpack.c.b16 %v138, %v138
    %v145 = vpack.c.b16 %v139, %v139
    %v146 = vpack.c.b16 %v140, %v140
    %v147 = vpack.c.b16 %v141, %v141
    %v148 = vpack.c.b16 %v142, %v142
    %v251 = vunpack.c.l.b16 %v37
    %v252 = vunpack.c.l.b16 %v38
    %v253 = vunpack.c.l.b16 %v39
    %v254 = vunpack.c.l.b16 %v40
    %v255 = vunpack.c.l.b16 %v41
    %v256 = vunpack.c.l.b16 %v42
    %v257 = vunpack.c.l.b16 %v43
    %v258 = vunpack.c.l.b16 %v44
    %v259 = vunpack.c.l.b16 %v45
    %v260 = vunpack.c.l.b16 %v46
    %v261 = vunpack.c.l.b16 %v47
    %v262 = vunpack.c.l.b16 %v48
    %v263 = vunpack.c.l.b16 %v49
    %v264 = vunpack.c.l.b16 %v50
    %v265 = vunpack.c.l.b16 %v51
    %v266 = vunpack.c.l.b16 %v52
    %v267 = vunpack.c.l.b16 %v53
    %v268 = vunpack.c.l.b16 %v54
    %v269 = vunpack.c.l.b16 %v55
    %v270 = vunpack.c.l.b16 %v56
    %v271 = vunpack.c.l.b16 %v57
    %v272 = vunpack.c.l.b16 %v58
    %v273 = vunpack.c.l.b16 %v59
    %v274 = vunpack.c.l.b16 %v60
    %v275 = vunpack.c.l.b16 %v61
    %v276 = vunpack.c.l.b16 %v62
    %v277 = vunpack.c.l.b16 %v63
    %v278 = vunpack.c.l.b16 %v64
    %v279 = vunpack.c.l.b16 %v65
    %v280 = vunpack.c.l.b16 %v66
    %v281 = vunpack.c.l.b16 %v67
    %v282 = vunpack.c.l.b16 %v68
    %v283 = vunpack.c.l.b16 %v69
    %v284 = vunpack.c.l.b16 %v70
    %v285 = vunpack.c.l.b16 %v71
    %v286 = vunpack.c.l.b16 %v72
    %v287 = vunpack.c.l.b16 %v73
    %v288 = vunpack.c.l.b16 %v74
    %v289 = vunpack.c.l.b16 %v75
    %v290 = vunpack.c.l.b16 %v76
    %v291 = vunpack.c.l.b16 %v77
    %v292 = vunpack.c.l.b16 %v78
    %v293 = vunpack.c.l.b16 %v79
    %v294 = vunpack.c.l.b16 %v80
    %v295 = vunpack.c.l.b16 %v81
    %v296 = vunpack.c.l.b16 %v82
    %v297 = vunpack.c.l.b16 %v83
    %v298 = vunpack.c.l.b16 %v84
    %v299 = vunpack.c.l.b16 %v85
    %v300 = vunpack.c.l.b16 %v86
    %v301 = vunpack.c.l.b16 %v87
    %v302 = vunpack.c.l.b16 %v88
    %v303 = vunpack.c.l.b16 %v89
    %v304 = vunpack.c.l.b16 %v90
    %v305 = vunpack.c.l.b16 %v91
    %v306 = vunpack.c.l.b16 %v92
    %v307 = vunpack.c.l.b16 %v93
    %v308 = vunpack.c.l.b16 %v94
    %v309 = vunpack.c.l.b16 %v95
    %v310 = vunpack.c.l.b16 %v96
    %v311 = vunpack.c.l.b16 %v97
    %v312 = vunpack.c.l.b16 %v98
    %v313 = vunpack.c.l.b16 %v99
    %v314 = vunpack.c.l.b16 %v100
    %v315 = vunpack.c.l.b16 %v101
    %v316 = vunpack.c.l.b16 %v102
    %v317 = vunpack.c.l.b16 %v103
    %v318 = vunpack.c.l.b16 %v104
    %v319 = vunpack.c.l.b16 %v105
    %v320 = vunpack.c.l.b16 %v106
    %v321 = vunpack.c.l.b16 %v107
    %v322 = vunpack.c.l.b16 %v108
    %v323 = vunpack.c.l.b16 %v109
    %v324 = vunpack.c.l.b16 %v110
    %v325 = vunpack.c.l.b16 %v111
    %v326 = vunpack.c.l.b16 %v112
    %v327 = vunpack.c.l.b16 %v113
    %v328 = vunpack.c.l.b16 %v114
    %v329 = vunpack.c.l.b16 %v115
    %v330 = vunpack.c.l.b16 %v116
    %v331 = vunpack.c.l.b16 %v117
    %v332 = vunpack.c.l.b16 %v118
    %v333 = vunpack.c.l.b16 %v119
    %v334 = vunpack.c.l.b16 %v120
    %v335 = vunpack.c.l.b16 %v121
    %v336 = vunpack.c.l.b16 %v122
    %v337 = vunpack.c.l.b16 %v123
    %v338 = vunpack.c.l.b16 %v124
    %v339 = vunpack.c.l.b16 %v125
    %v340 = vunpack.c.l.b16 %v126
    %v341 = vunpack.c.l.b16 %v127
    %v342 = vunpack.c.l.b16 %v128
    %v343 = vunpack.c.l.b16 %v129
    %v344 = vunpack.c.l.b16 %v130
    %v345 = vunpack.c.l.b16 %v131
    %v346 = vunpack.c.l.b16 %v132
    %v347 = vpack.c.b16 %v252, %v251
    %v348 = vpack.c.b16 %v254, %v253
    %v349 = vpack.c.b16 %v256, %v255
    %v350 = vpack.c.b16 %v258, %v257
    %v351 = vpack.c.b16 %v260, %v259
    %v352 = vpack.c.b16 %v262, %v261
    %v353 = vpack.c.b16 %v264, %v263
    %v354 = vpack.c.b16 %v266, %v265
    %v355 = vpack.c.b16 %v268, %v267
    %v356 = vpack.c.b16 %v270, %v269
    %v357 = vpack.c.b16 %v272, %v271
    %v358 = vpack.c.b16 %v274, %v273
    %v359 = vpack.c.b16 %v276, %v275
    %v360 = vpack.c.b16 %v278, %v277
    %v361 = vpack.c.b16 %v280, %v279
    %v362 = vpack.c.b16 %v282, %v281
    %v363 = vpack.c.b16 %v284, %v283
    %v364 = vpack.c.b16 %v286, %v285
    %v365 = vpack.c.b16 %v288, %v287
    %v366 = vpack.c.b16 %v290, %v289
    %v367 = vpack.c.b16 %v292, %v291
    %v368 = vpack.c.b16 %v294, %v293
    %v369 = vpack.c.b16 %v296, %v295
    %v370 = vpack.c.b16 %v298, %v297
    %v371 = vpack.c.b16 %v300, %v299
    %v372 = vpack.c.b16 %v302, %v301
    %v373 = vpack.c.b16 %v304, %v303
    %v374 = vpack.c.b16 %v306, %v305
    %v375 = vpack.c.b16 %v308, %v307
    %v376 = vpack.c.b16 %v310, %v309
    %v377 = vpack.c.b16 %v312, %v311
    %v378 = vpack.c.b16 %v314, %v313
    %v379 = vpack.c.b16 %v316, %v315
    %v380 = vpack.c.b16 %v318, %v317
    %v381 = vpack.c.b16 %v320, %v319
    %v382 = vpack.c.b16 %v322, %v321
    %v383 = vpack.c.b16 %v324, %v323
    %v384 = vpack.c.b16 %v326, %v325
    %v385 = vpack.c.b16 %v328, %v327
    %v386 = vpack.c.b16 %v330, %v329
    %v387 = vpack.c.b16 %v332, %v331
    %v388 = vpack.c.b16 %v334, %v333
    %v389 = vpack.c.b16 %v336, %v335
    %v390 = vpack.c.b16 %v338, %v337
    %v391 = vpack.c.b16 %v340, %v339
    %v392 = vpack.c.b16 %v342, %v341
    %v393 = vpack.c.b16 %v344, %v343
    %v394 = vpack.c.b16 %v346, %v345
    %443 = vmatprep.subr.bf16.mxu0 0
    %444 = vmatpush1.bf16.msra.mxu0 %v347
    %445 = vmatprep.subr.bf16.mxu0 0
    %446 = vmatpush1.bf16.msra.mxu0 %v348
    %447 = vmatprep.subr.bf16.mxu0 0
    %448 = vmatpush1.bf16.msra.mxu0 %v349
    %449 = vmatprep.subr.bf16.mxu0 0
    %450 = vmatpush1.bf16.msra.mxu0 %v350
    %451 = vmatprep.subr.bf16.mxu0 0
    %452 = vmatpush1.bf16.msra.mxu0 %v351
    %453 = vmatprep.subr.bf16.mxu0 0
    %454 = vmatpush1.bf16.msra.mxu0 %v352
    %455 = vmatprep.subr.bf16.mxu0 0
    %456 = vmatpush1.bf16.msra.mxu0 %v353
    %457 = vmatprep.subr.bf16.mxu0 0
    %458 = vmatpush1.bf16.msra.mxu0 %v354
    %459 = vmatprep.subr.bf16.mxu0 0
    %460 = vmatpush1.bf16.msra.mxu0 %v355
    %461 = vmatprep.subr.bf16.mxu0 0
    %462 = vmatpush1.bf16.msra.mxu0 %v356
    %463 = vmatprep.subr.bf16.mxu0 0
    %464 = vmatpush1.bf16.msra.mxu0 %v357
    %465 = vmatprep.subr.bf16.mxu0 0
    %466 = vmatpush1.bf16.msra.mxu0 %v358
    %467 = vmatprep.subr.bf16.mxu0 0
    %468 = vmatpush1.bf16.msra.mxu0 %v359
    %469 = vmatprep.subr.bf16.mxu0 0
    %470 = vmatpush1.bf16.msra.mxu0 %v360
    %471 = vmatprep.subr.bf16.mxu0 0
    %472 = vmatpush1.bf16.msra.mxu0 %v361
    %473 = vmatprep.subr.bf16.mxu0 0
    %474 = vmatpush1.bf16.msra.mxu0 %v362
    %475 = vmatprep.mubr.bf16.mxu0 %v144
    %476 = vmatmul.mubr.bf16.gmra.mrb[0].mxu0 %v143
    %v477 = vpop.f32.mrb[0].mxu0
    %v478 = vadd.f32 %v133, %v477
    %v479 = vpop.f32.mrb[0].mxu0
    %v480 = vpop.f32.mrb[0].mxu0
    %v481 = vpop.f32.mrb[0].mxu0
    %482 = vdwg.mxu0
    %483 = vmatprep.subr.bf16.mxu0 0
    %484 = vmatpush1.bf16.msra.mxu0 %v363
    %485 = vmatprep.subr.bf16.mxu0 0
    %486 = vmatpush1.bf16.msra.mxu0 %v364
    %487 = vmatprep.subr.bf16.mxu0 0
    %488 = vmatpush1.bf16.msra.mxu0 %v365
    %489 = vmatprep.subr.bf16.mxu0 0
    %490 = vmatpush1.bf16.msra.mxu0 %v366
    %491 = vmatprep.subr.bf16.mxu0 0
    %492 = vmatpush1.bf16.msra.mxu0 %v367
    %493 = vmatprep.subr.bf16.mxu0 0
    %494 = vmatpush1.bf16.msra.mxu0 %v368
    %495 = vmatprep.subr.bf16.mxu0 0
    %496 = vmatpush1.bf16.msra.mxu0 %v369
    %497 = vmatprep.subr.bf16.mxu0 0
    %498 = vmatpush1.bf16.msra.mxu0 %v370
    %499 = vmatprep.subr.bf16.mxu0 0
    %500 = vmatpush1.bf16.msra.mxu0 %v371
    %501 = vmatprep.subr.bf16.mxu0 0
    %502 = vmatpush1.bf16.msra.mxu0 %v372
    %503 = vmatprep.subr.bf16.mxu0 0
    %504 = vmatpush1.bf16.msra.mxu0 %v373
    %505 = vmatprep.subr.bf16.mxu0 0
    %506 = vmatpush1.bf16.msra.mxu0 %v374
    %507 = vmatprep.subr.bf16.mxu0 0
    %508 = vmatpush1.bf16.msra.mxu0 %v375
    %509 = vmatprep.subr.bf16.mxu0 0
    %510 = vmatpush1.bf16.msra.mxu0 %v376
    %511 = vmatprep.subr.bf16.mxu0 0
    %512 = vmatpush1.bf16.msra.mxu0 %v377
    %513 = vmatprep.subr.bf16.mxu0 0
    %514 = vmatpush1.bf16.msra.mxu0 %v378
    %515 = vmatprep.mubr.bf16.mxu0 %v146
    %516 = vmatmul.mubr.bf16.gmra.mrb[0].mxu0 %v145
    %v517 = vpop.f32.mrb[0].mxu0
    %v518 = vadd.f32 %v478, %v517
    %v519 = vpop.f32.mrb[0].mxu0
    %v520 = vpop.f32.mrb[0].mxu0
    %v521 = vpop.f32.mrb[0].mxu0
    %522 = vdwg.mxu0
    %523 = vmatprep.subr.bf16.mxu0 0
    %524 = vmatpush1.bf16.msra.mxu0 %v379
    %525 = vmatprep.subr.bf16.mxu0 0
    %526 = vmatpush1.bf16.msra.mxu0 %v380
    %527 = vmatprep.subr.bf16.mxu0 0
    %528 = vmatpush1.bf16.msra.mxu0 %v381
    %529 = vmatprep.subr.bf16.mxu0 0
    %530 = vmatpush1.bf16.msra.mxu0 %v382
    %531 = vmatprep.subr.bf16.mxu0 0
    %532 = vmatpush1.bf16.msra.mxu0 %v383
    %533 = vmatprep.subr.bf16.mxu0 0
    %534 = vmatpush1.bf16.msra.mxu0 %v384
    %535 = vmatprep.subr.bf16.mxu0 0
    %536 = vmatpush1.bf16.msra.mxu0 %v385
    %537 = vmatprep.subr.bf16.mxu0 0
    %538 = vmatpush1.bf16.msra.mxu0 %v386
    %539 = vmatprep.subr.bf16.mxu0 0
    %540 = vmatpush1.bf16.msra.mxu0 %v387
    %541 = vmatprep.subr.bf16.mxu0 0
    %542 = vmatpush1.bf16.msra.mxu0 %v388
    %543 = vmatprep.subr.bf16.mxu0 0
    %544 = vmatpush1.bf16.msra.mxu0 %v389
    %545 = vmatprep.subr.bf16.mxu0 0
    %546 = vmatpush1.bf16.msra.mxu0 %v390
    %547 = vmatprep.subr.bf16.mxu0 0
    %548 = vmatpush1.bf16.msra.mxu0 %v391
    %549 = vmatprep.subr.bf16.mxu0 0
    %550 = vmatpush1.bf16.msra.mxu0 %v392
    %551 = vmatprep.subr.bf16.mxu0 0
    %552 = vmatpush1.bf16.msra.mxu0 %v393
    %553 = vmatprep.subr.bf16.mxu0 0
    %554 = vmatpush1.bf16.msra.mxu0 %v394
    %555 = vmatprep.mubr.bf16.mxu0 %v148
    %556 = vmatmul.mubr.bf16.gmra.mrb[0].mxu0 %v147
    %v557 = vpop.f32.mrb[0].mxu0
    %v558 = vadd.f32 %v518, %v557
    %v559 = vpop.f32.mrb[0].mxu0
    %v560 = vpop.f32.mrb[0].mxu0
    %v561 = vpop.f32.mrb[0].mxu0
    %562 = vdwg.mxu0
    %v563 = vmax.f32 %v558, 0.0
    %v564 = vpack.c.bf16 %v563, %v563
    %v565 = vld [vmem:[#allocation2 + $0x180] sm:$0xf]
    %v566 = vld [vmem:[#allocation2 + $0x184] sm:$0xf]
    %v567 = vld [vmem:[#allocation2 + $0x188] sm:$0xf]
    %v568 = vld [vmem:[#allocation2 + $0x18c] sm:$0xf]
    %v569 = vld [vmem:[#allocation2 + $0x190] sm:$0xf]
    %v570 = vld [vmem:[#allocation2 + $0x194] sm:$0xf]
    %v571 = vld [vmem:[#allocation2 + $0x198] sm:$0xf]
    %v572 = vld [vmem:[#allocation2 + $0x19c] sm:$0xf]
    %v573 = vld [vmem:[#allocation2 + $0x1a0] sm:$0xf]
    %v574 = vld [vmem:[#allocation2 + $0x1a4] sm:$0xf]
    %v575 = vld [vmem:[#allocation2 + $0x1a8] sm:$0xf]
    %v576 = vld [vmem:[#allocation2 + $0x1ac] sm:$0xf]
    %v577 = vld [vmem:[#allocation2 + $0x1b0] sm:$0xf]
    %v578 = vld [vmem:[#allocation2 + $0x1b4] sm:$0xf]
    %v579 = vld [vmem:[#allocation2 + $0x1b8] sm:$0xf]
    %v580 = vld [vmem:[#allocation2 + $0x1bc] sm:$0xf]
    %s581 = scalar_lea.vmem %s3, 8
    %v582 = vld [vmem:[%s581] sm:$0xff]
    %v599 = vunpack.c.l.b16 %v565
    %v600 = vunpack.c.l.b16 %v566
    %v601 = vunpack.c.l.b16 %v567
    %v602 = vunpack.c.l.b16 %v568
    %v603 = vunpack.c.l.b16 %v569
    %v604 = vunpack.c.l.b16 %v570
    %v605 = vunpack.c.l.b16 %v571
    %v606 = vunpack.c.l.b16 %v572
    %v607 = vunpack.c.l.b16 %v573
    %v608 = vunpack.c.l.b16 %v574
    %v609 = vunpack.c.l.b16 %v575
    %v610 = vunpack.c.l.b16 %v576
    %v611 = vunpack.c.l.b16 %v577
    %v612 = vunpack.c.l.b16 %v578
    %v613 = vunpack.c.l.b16 %v579
    %v614 = vunpack.c.l.b16 %v580
    %v615 = vpack.c.b16 %v600, %v599
    %v616 = vpack.c.b16 %v602, %v601
    %v617 = vpack.c.b16 %v604, %v603
    %v618 = vpack.c.b16 %v606, %v605
    %v619 = vpack.c.b16 %v608, %v607
    %v620 = vpack.c.b16 %v610, %v609
    %v621 = vpack.c.b16 %v612, %v611
    %v622 = vpack.c.b16 %v614, %v613
    %631 = vmatprep.subr.bf16.mxu0 0
    %632 = vmatpush1.bf16.msra.mxu0 %v615
    %633 = vmatprep.subr.bf16.mxu0 0
    %634 = vmatpush1.bf16.msra.mxu0 %v616
    %635 = vmatprep.subr.bf16.mxu0 0
    %636 = vmatpush1.bf16.msra.mxu0 %v617
    %637 = vmatprep.subr.bf16.mxu0 0
    %638 = vmatpush1.bf16.msra.mxu0 %v618
    %639 = vmatprep.subr.bf16.mxu0 0
    %640 = vmatpush1.bf16.msra.mxu0 %v619
    %641 = vmatprep.subr.bf16.mxu0 0
    %642 = vmatpush1.bf16.msra.mxu0 %v620
    %643 = vmatprep.subr.bf16.mxu0 0
    %644 = vmatpush1.bf16.msra.mxu0 %v621
    %645 = vmatprep.subr.bf16.mxu0 0
    %646 = vmatpush1.bf16.msra.mxu0 %v622
    %647 = vmatprep.subr.bf16.mxu0 0
    %648 = vmatpush1.bf16.msra.mxu0 0
    %649 = vmatprep.subr.bf16.mxu0 0
    %650 = vmatpush1.bf16.msra.mxu0 0
    %651 = vmatprep.subr.bf16.mxu0 0
    %652 = vmatpush1.bf16.msra.mxu0 0
    %653 = vmatprep.subr.bf16.mxu0 0
    %654 = vmatpush1.bf16.msra.mxu0 0
    %655 = vmatprep.subr.bf16.mxu0 0
    %656 = vmatpush1.bf16.msra.mxu0 0
    %657 = vmatprep.subr.bf16.mxu0 0
    %658 = vmatpush1.bf16.msra.mxu0 0
    %659 = vmatprep.subr.bf16.mxu0 0
    %660 = vmatpush1.bf16.msra.mxu0 0
    %661 = vmatprep.subr.bf16.mxu0 0
    %662 = vmatpush1.bf16.msra.mxu0 0
    %663 = vmatprep.mubr.bf16.mxu0 0
    %664 = vmatmul.mubr.bf16.gmra.mrb[0].mxu0 %v564
    %v665 = vpop.f32.mrb[0].mxu0
    %v666 = vadd.f32 %v582, %v665
    %v667 = vpop.f32.mrb[0].mxu0
    %v668 = vpop.f32.mrb[0].mxu0
    %v669 = vpop.f32.mrb[0].mxu0
    %670 = vdwg.mxu0
    %v671 = vmax.f32 %v666, 0.0
    %v672 = vpack.c.bf16 %v671, %v671
    %v673 = vld [vmem:[#allocation2 + $0x1c0] sm:$0xf]
    %v674 = vld [vmem:[#allocation2 + $0x1c4] sm:$0xf]
    %v675 = vld [vmem:[#allocation2 + $0x1c8] sm:$0xf]
    %v676 = vld [vmem:[#allocation2 + $0x1cc] sm:$0xf]
    %v677 = vld [vmem:[#allocation2 + $0x1d0] sm:$0xf]
    %v678 = vld [vmem:[#allocation2 + $0x1d4] sm:$0xf]
    %v679 = vld [vmem:[#allocation2 + $0x1d8] sm:$0xf]
    %v680 = vld [vmem:[#allocation2 + $0x1dc] sm:$0xf]
    %v681 = vld [vmem:[#allocation2 + $0x1e0] sm:$0xf]
    %v682 = vld [vmem:[#allocation2 + $0x1e4] sm:$0xf]
    %v683 = vld [vmem:[#allocation2 + $0x1e8] sm:$0xf]
    %v684 = vld [vmem:[#allocation2 + $0x1ec] sm:$0xf]
    %v685 = vld [vmem:[#allocation2 + $0x1f0] sm:$0xf]
    %v686 = vld [vmem:[#allocation2 + $0x1f4] sm:$0xf]
    %v687 = vld [vmem:[#allocation2 + $0x1f8] sm:$0xf]
    %v688 = vld [vmem:[#allocation2 + $0x1fc] sm:$0xf]
    %s689 = scalar_lea.vmem %s3, 16
    %v690 = vld [vmem:[%s689] sm:$0xff]
    %v707 = vunpack.c.l.b16 %v673
    %v708 = vunpack.c.l.b16 %v674
    %v709 = vunpack.c.l.b16 %v675
    %v710 = vunpack.c.l.b16 %v676
    %v711 = vunpack.c.l.b16 %v677
    %v712 = vunpack.c.l.b16 %v678
    %v713 = vunpack.c.l.b16 %v679
    %v714 = vunpack.c.l.b16 %v680
    %v715 = vunpack.c.l.b16 %v681
    %v716 = vunpack.c.l.b16 %v682
    %v717 = vunpack.c.l.b16 %v683
    %v718 = vunpack.c.l.b16 %v684
    %v719 = vunpack.c.l.b16 %v685
    %v720 = vunpack.c.l.b16 %v686
    %v721 = vunpack.c.l.b16 %v687
    %v722 = vunpack.c.l.b16 %v688
    %v723 = vpack.c.b16 %v708, %v707
    %v724 = vpack.c.b16 %v710, %v709
    %v725 = vpack.c.b16 %v712, %v711
    %v726 = vpack.c.b16 %v714, %v713
    %v727 = vpack.c.b16 %v716, %v715
    %v728 = vpack.c.b16 %v718, %v717
    %v729 = vpack.c.b16 %v720, %v719
    %v730 = vpack.c.b16 %v722, %v721
    %739 = vmatprep.subr.bf16.mxu0 0
    %740 = vmatpush1.bf16.msra.mxu0 %v723
    %741 = vmatprep.subr.bf16.mxu0 0
    %742 = vmatpush1.bf16.msra.mxu0 %v724
    %743 = vmatprep.subr.bf16.mxu0 0
    %744 = vmatpush1.bf16.msra.mxu0 %v725
    %745 = vmatprep.subr.bf16.mxu0 0
    %746 = vmatpush1.bf16.msra.mxu0 %v726
    %747 = vmatprep.subr.bf16.mxu0 0
    %748 = vmatpush1.bf16.msra.mxu0 %v727
    %749 = vmatprep.subr.bf16.mxu0 0
    %750 = vmatpush1.bf16.msra.mxu0 %v728
    %751 = vmatprep.subr.bf16.mxu0 0
    %752 = vmatpush1.bf16.msra.mxu0 %v729
    %753 = vmatprep.subr.bf16.mxu0 0
    %754 = vmatpush1.bf16.msra.mxu0 %v730
    %755 = vmatprep.subr.bf16.mxu0 0
    %756 = vmatpush1.bf16.msra.mxu0 0
    %757 = vmatprep.subr.bf16.mxu0 0
    %758 = vmatpush1.bf16.msra.mxu0 0
    %759 = vmatprep.subr.bf16.mxu0 0
    %760 = vmatpush1.bf16.msra.mxu0 0
    %761 = vmatprep.subr.bf16.mxu0 0
    %762 = vmatpush1.bf16.msra.mxu0 0
    %763 = vmatprep.subr.bf16.mxu0 0
    %764 = vmatpush1.bf16.msra.mxu0 0
    %765 = vmatprep.subr.bf16.mxu0 0
    %766 = vmatpush1.bf16.msra.mxu0 0
    %767 = vmatprep.subr.bf16.mxu0 0
    %768 = vmatpush1.bf16.msra.mxu0 0
    %769 = vmatprep.subr.bf16.mxu0 0
    %770 = vmatpush1.bf16.msra.mxu0 0
    %771 = vmatprep.mubr.bf16.mxu0 0
    %772 = vmatmul.mubr.bf16.gmra.mrb[0].mxu0 %v672
    %v773 = vpop.f32.mrb[0].mxu0
    %v774 = vadd.f32 %v690, %v773
    %v775 = vpop.f32.mrb[0].mxu0
    %v776 = vpop.f32.mrb[0].mxu0
    %v777 = vpop.f32.mrb[0].mxu0
    %778 = vdwg.mxu0
    %v779 = vmax.f32 %v774, 0.0
    %v780 = vpack.c.bf16 %v779, %v779
    %v781 = vld [vmem:[#allocation2 + $0x200] sm:$0xf]
    %v782 = vld [vmem:[#allocation2 + $0x204] sm:$0xf]
    %v783 = vld [vmem:[#allocation2 + $0x208] sm:$0xf]
    %v784 = vld [vmem:[#allocation2 + $0x20c] sm:$0xf]
    %v785 = vld [vmem:[#allocation2 + $0x210] sm:$0xf]
    %v786 = vld [vmem:[#allocation2 + $0x214] sm:$0xf]
    %v787 = vld [vmem:[#allocation2 + $0x218] sm:$0xf]
    %v788 = vld [vmem:[#allocation2 + $0x21c] sm:$0xf]
    %v789 = vld [vmem:[#allocation2 + $0x220] sm:$0xf]
    %v790 = vld [vmem:[#allocation2 + $0x224] sm:$0xf]
    %v791 = vld [vmem:[#allocation2 + $0x228] sm:$0xf]
    %v792 = vld [vmem:[#allocation2 + $0x22c] sm:$0xf]
    %v793 = vld [vmem:[#allocation2 + $0x230] sm:$0xf]
    %v794 = vld [vmem:[#allocation2 + $0x234] sm:$0xf]
    %v795 = vld [vmem:[#allocation2 + $0x238] sm:$0xf]
    %v796 = vld [vmem:[#allocation2 + $0x23c] sm:$0xf]
    %v797 = vld [vmem:[#allocation2 + $0x240] sm:$0xf]
    %v798 = vld [vmem:[#allocation2 + $0x244] sm:$0xf]
    %v799 = vld [vmem:[#allocation2 + $0x248] sm:$0xf]
    %v800 = vld [vmem:[#allocation2 + $0x24c] sm:$0xf]
    %v801 = vld [vmem:[#allocation2 + $0x250] sm:$0xf]
    %v802 = vld [vmem:[#allocation2 + $0x254] sm:$0xf]
    %v803 = vld [vmem:[#allocation2 + $0x258] sm:$0xf]
    %v804 = vld [vmem:[#allocation2 + $0x25c] sm:$0xf]
    %v805 = vld [vmem:[#allocation2 + $0x260] sm:$0xf]
    %v806 = vld [vmem:[#allocation2 + $0x264] sm:$0xf]
    %v807 = vld [vmem:[#allocation2 + $0x268] sm:$0xf]
    %v808 = vld [vmem:[#allocation2 + $0x26c] sm:$0xf]
    %v809 = vld [vmem:[#allocation2 + $0x270] sm:$0xf]
    %v810 = vld [vmem:[#allocation2 + $0x274] sm:$0xf]
    %v811 = vld [vmem:[#allocation2 + $0x278] sm:$0xf]
    %v812 = vld [vmem:[#allocation2 + $0x27c] sm:$0xf]
    %v813 = vld [vmem:[#allocation2 + $0x280] sm:$0xf]
    %v814 = vld [vmem:[#allocation2 + $0x284] sm:$0xf]
    %v815 = vld [vmem:[#allocation2 + $0x288] sm:$0xf]
    %v816 = vld [vmem:[#allocation2 + $0x28c] sm:$0xf]
    %v817 = vld [vmem:[#allocation2 + $0x290] sm:$0xf]
    %v818 = vld [vmem:[#allocation2 + $0x294] sm:$0xf]
    %v819 = vld [vmem:[#allocation2 + $0x298] sm:$0xf]
    %v820 = vld [vmem:[#allocation2 + $0x29c] sm:$0xf]
    %v821 = vld [vmem:[#allocation2 + $0x2a0] sm:$0xf]
    %v822 = vld [vmem:[#allocation2 + $0x2a4] sm:$0xf]
    %v823 = vld [vmem:[#allocation2 + $0x2a8] sm:$0xf]
    %v824 = vld [vmem:[#allocation2 + $0x2ac] sm:$0xf]
    %v825 = vld [vmem:[#allocation2 + $0x2b0] sm:$0xf]
    %v826 = vld [vmem:[#allocation2 + $0x2b4] sm:$0xf]
    %v827 = vld [vmem:[#allocation2 + $0x2b8] sm:$0xf]
    %v828 = vld [vmem:[#allocation2 + $0x2bc] sm:$0xf]
    %s829 = scalar_lea.vmem %s3, 24
    %v830 = vld [vmem:[%s829] sm:$0xff]
    %v833 = vunpack.c.l.b16 %v35
    %v834 = vunpack.c.h.b16 %v35
    %v835 = vunpack.c.l.b16 %v36
    %v836 = vpack.c.b16 %v833, %v833
    %v837 = vpack.c.b16 %v834, %v834
    %v838 = vpack.c.b16 %v835, %v835
    %v890 = vunpack.c.l.b16 %v781
    %v891 = vunpack.c.l.b16 %v782
    %v892 = vunpack.c.l.b16 %v783
    %v893 = vunpack.c.l.b16 %v784
    %v894 = vunpack.c.l.b16 %v785
    %v895 = vunpack.c.l.b16 %v786
    %v896 = vunpack.c.l.b16 %v787
    %v897 = vunpack.c.l.b16 %v788
    %v898 = vunpack.c.l.b16 %v789
    %v899 = vunpack.c.l.b16 %v790
    %v900 = vunpack.c.l.b16 %v791
    %v901 = vunpack.c.l.b16 %v792
    %v902 = vunpack.c.l.b16 %v793
    %v903 = vunpack.c.l.b16 %v794
    %v904 = vunpack.c.l.b16 %v795
    %v905 = vunpack.c.l.b16 %v796
    %v906 = vunpack.c.l.b16 %v797
    %v907 = vunpack.c.l.b16 %v798
    %v908 = vunpack.c.l.b16 %v799
    %v909 = vunpack.c.l.b16 %v800
    %v910 = vunpack.c.l.b16 %v801
    %v911 = vunpack.c.l.b16 %v802
    %v912 = vunpack.c.l.b16 %v803
    %v913 = vunpack.c.l.b16 %v804
    %v914 = vunpack.c.l.b16 %v805
    %v915 = vunpack.c.l.b16 %v806
    %v916 = vunpack.c.l.b16 %v807
    %v917 = vunpack.c.l.b16 %v808
    %v918 = vunpack.c.l.b16 %v809
    %v919 = vunpack.c.l.b16 %v810
    %v920 = vunpack.c.l.b16 %v811
    %v921 = vunpack.c.l.b16 %v812
    %v922 = vunpack.c.l.b16 %v813
    %v923 = vunpack.c.l.b16 %v814
    %v924 = vunpack.c.l.b16 %v815
    %v925 = vunpack.c.l.b16 %v816
    %v926 = vunpack.c.l.b16 %v817
    %v927 = vunpack.c.l.b16 %v818
    %v928 = vunpack.c.l.b16 %v819
    %v929 = vunpack.c.l.b16 %v820
    %v930 = vunpack.c.l.b16 %v821
    %v931 = vunpack.c.l.b16 %v822
    %v932 = vunpack.c.l.b16 %v823
    %v933 = vunpack.c.l.b16 %v824
    %v934 = vunpack.c.l.b16 %v825
    %v935 = vunpack.c.l.b16 %v826
    %v936 = vunpack.c.l.b16 %v827
    %v937 = vunpack.c.l.b16 %v828
    %v938 = vpack.c.b16 %v891, %v890
    %v939 = vpack.c.b16 %v893, %v892
    %v940 = vpack.c.b16 %v895, %v894
    %v941 = vpack.c.b16 %v897, %v896
    %v942 = vpack.c.b16 %v899, %v898
    %v943 = vpack.c.b16 %v901, %v900
    %v944 = vpack.c.b16 %v903, %v902
    %v945 = vpack.c.b16 %v905, %v904
    %v946 = vpack.c.b16 %v907, %v906
    %v947 = vpack.c.b16 %v909, %v908
    %v948 = vpack.c.b16 %v911, %v910
    %v949 = vpack.c.b16 %v913, %v912
    %v950 = vpack.c.b16 %v915, %v914
    %v951 = vpack.c.b16 %v917, %v916
    %v952 = vpack.c.b16 %v919, %v918
    %v953 = vpack.c.b16 %v921, %v920
    %v954 = vpack.c.b16 %v923, %v922
    %v955 = vpack.c.b16 %v925, %v924
    %v956 = vpack.c.b16 %v927, %v926
    %v957 = vpack.c.b16 %v929, %v928
    %v958 = vpack.c.b16 %v931, %v930
    %v959 = vpack.c.b16 %v933, %v932
    %v960 = vpack.c.b16 %v935, %v934
    %v961 = vpack.c.b16 %v937, %v936
    %986 = vmatprep.subr.bf16.mxu0 0
    %987 = vmatpush1.bf16.msra.mxu0 %v938
    %988 = vmatprep.subr.bf16.mxu0 0
    %989 = vmatpush1.bf16.msra.mxu0 %v939
    %990 = vmatprep.subr.bf16.mxu0 0
    %991 = vmatpush1.bf16.msra.mxu0 %v940
    %992 = vmatprep.subr.bf16.mxu0 0
    %993 = vmatpush1.bf16.msra.mxu0 %v941
    %994 = vmatprep.subr.bf16.mxu0 0
    %995 = vmatpush1.bf16.msra.mxu0 %v942
    %996 = vmatprep.subr.bf16.mxu0 0
    %997 = vmatpush1.bf16.msra.mxu0 %v943
    %998 = vmatprep.subr.bf16.mxu0 0
    %999 = vmatpush1.bf16.msra.mxu0 %v944
    %1000 = vmatprep.subr.bf16.mxu0 0
    %1001 = vmatpush1.bf16.msra.mxu0 %v945
    %1002 = vmatprep.subr.bf16.mxu0 0
    %1003 = vmatpush1.bf16.msra.mxu0 %v946
    %1004 = vmatprep.subr.bf16.mxu0 0
    %1005 = vmatpush1.bf16.msra.mxu0 %v947
    %1006 = vmatprep.subr.bf16.mxu0 0
    %1007 = vmatpush1.bf16.msra.mxu0 %v948
    %1008 = vmatprep.subr.bf16.mxu0 0
    %1009 = vmatpush1.bf16.msra.mxu0 %v949
    %1010 = vmatprep.subr.bf16.mxu0 0
    %1011 = vmatpush1.bf16.msra.mxu0 %v950
    %1012 = vmatprep.subr.bf16.mxu0 0
    %1013 = vmatpush1.bf16.msra.mxu0 %v951
    %1014 = vmatprep.subr.bf16.mxu0 0
    %1015 = vmatpush1.bf16.msra.mxu0 %v952
    %1016 = vmatprep.subr.bf16.mxu0 0
    %1017 = vmatpush1.bf16.msra.mxu0 %v953
    %1018 = vmatprep.mubr.bf16.mxu0 %v837
    %1019 = vmatmul.mubr.bf16.gmra.mrb[0].mxu0 %v836
    %v1020 = vpop.f32.mrb[0].mxu0
    %v1021 = vadd.f32 %v830, %v1020
    %v1022 = vpop.f32.mrb[0].mxu0
    %v1023 = vpop.f32.mrb[0].mxu0
    %v1024 = vpop.f32.mrb[0].mxu0
    %1025 = vdwg.mxu0
    %1026 = vmatprep.subr.bf16.mxu0 0
    %1027 = vmatpush1.bf16.msra.mxu0 %v954
    %1028 = vmatprep.subr.bf16.mxu0 0
    %1029 = vmatpush1.bf16.msra.mxu0 %v955
    %1030 = vmatprep.subr.bf16.mxu0 0
    %1031 = vmatpush1.bf16.msra.mxu0 %v956
    %1032 = vmatprep.subr.bf16.mxu0 0
    %1033 = vmatpush1.bf16.msra.mxu0 %v957
    %1034 = vmatprep.subr.bf16.mxu0 0
    %1035 = vmatpush1.bf16.msra.mxu0 %v958
    %1036 = vmatprep.subr.bf16.mxu0 0
    %1037 = vmatpush1.bf16.msra.mxu0 %v959
    %1038 = vmatprep.subr.bf16.mxu0 0
    %1039 = vmatpush1.bf16.msra.mxu0 %v960
    %1040 = vmatprep.subr.bf16.mxu0 0
    %1041 = vmatpush1.bf16.msra.mxu0 %v961
    %1042 = vmatprep.subr.bf16.mxu0 0
    %1043 = vmatpush1.bf16.msra.mxu0 0
    %1044 = vmatprep.subr.bf16.mxu0 0
    %1045 = vmatpush1.bf16.msra.mxu0 0
    %1046 = vmatprep.subr.bf16.mxu0 0
    %1047 = vmatpush1.bf16.msra.mxu0 0
    %1048 = vmatprep.subr.bf16.mxu0 0
    %1049 = vmatpush1.bf16.msra.mxu0 0
    %1050 = vmatprep.subr.bf16.mxu0 0
    %1051 = vmatpush1.bf16.msra.mxu0 0
    %1052 = vmatprep.subr.bf16.mxu0 0
    %1053 = vmatpush1.bf16.msra.mxu0 0
    %1054 = vmatprep.subr.bf16.mxu0 0
    %1055 = vmatpush1.bf16.msra.mxu0 0
    %1056 = vmatprep.subr.bf16.mxu0 0
    %1057 = vmatpush1.bf16.msra.mxu0 0
    %1058 = vmatprep.mubr.bf16.mxu0 0
    %1059 = vmatmul.mubr.bf16.gmra.mrb[0].mxu0 %v838
    %v1060 = vpop.f32.mrb[0].mxu0
    %v1061 = vadd.f32 %v1021, %v1060
    %v1062 = vpop.f32.mrb[0].mxu0
    %v1063 = vpop.f32.mrb[0].mxu0
    %v1064 = vpop.f32.mrb[0].mxu0
    %1065 = vdwg.mxu0
    %v1066 = vmax.f32 %v1061, 0.0
    %v1067 = vpack.c.bf16 %v1066, %v1066
    %v1068 = vld [vmem:[#allocation2 + $0x2c0] sm:$0xf]
    %v1069 = vld [vmem:[#allocation2 + $0x2c4] sm:$0xf]
    %v1070 = vld [vmem:[#allocation2 + $0x2c8] sm:$0xf]
    %v1071 = vld [vmem:[#allocation2 + $0x2cc] sm:$0xf]
    %v1072 = vld [vmem:[#allocation2 + $0x2d0] sm:$0xf]
    %v1073 = vld [vmem:[#allocation2 + $0x2d4] sm:$0xf]
    %v1074 = vld [vmem:[#allocation2 + $0x2d8] sm:$0xf]
    %v1075 = vld [vmem:[#allocation2 + $0x2dc] sm:$0xf]
    %v1076 = vld [vmem:[#allocation2 + $0x2e0] sm:$0xf]
    %v1077 = vld [vmem:[#allocation2 + $0x2e4] sm:$0xf]
    %v1078 = vld [vmem:[#allocation2 + $0x2e8] sm:$0xf]
    %v1079 = vld [vmem:[#allocation2 + $0x2ec] sm:$0xf]
    %v1080 = vld [vmem:[#allocation2 + $0x2f0] sm:$0xf]
    %v1081 = vld [vmem:[#allocation2 + $0x2f4] sm:$0xf]
    %v1082 = vld [vmem:[#allocation2 + $0x2f8] sm:$0xf]
    %v1083 = vld [vmem:[#allocation2 + $0x2fc] sm:$0xf]
    %s1084 = scalar_lea.vmem %s3, 32
    %v1085 = vld [vmem:[%s1084] sm:$0xff]
    %v1102 = vunpack.c.l.b16 %v1068
    %v1103 = vunpack.c.l.b16 %v1069
    %v1104 = vunpack.c.l.b16 %v1070
    %v1105 = vunpack.c.l.b16 %v1071
    %v1106 = vunpack.c.l.b16 %v1072
    %v1107 = vunpack.c.l.b16 %v1073
    %v1108 = vunpack.c.l.b16 %v1074
    %v1109 = vunpack.c.l.b16 %v1075
    %v1110 = vunpack.c.l.b16 %v1076
    %v1111 = vunpack.c.l.b16 %v1077
    %v1112 = vunpack.c.l.b16 %v1078
    %v1113 = vunpack.c.l.b16 %v1079
    %v1114 = vunpack.c.l.b16 %v1080
    %v1115 = vunpack.c.l.b16 %v1081
    %v1116 = vunpack.c.l.b16 %v1082
    %v1117 = vunpack.c.l.b16 %v1083
    %v1118 = vpack.c.b16 %v1103, %v1102
    %v1119 = vpack.c.b16 %v1105, %v1104
    %v1120 = vpack.c.b16 %v1107, %v1106
    %v1121 = vpack.c.b16 %v1109, %v1108
    %v1122 = vpack.c.b16 %v1111, %v1110
    %v1123 = vpack.c.b16 %v1113, %v1112
    %v1124 = vpack.c.b16 %v1115, %v1114
    %v1125 = vpack.c.b16 %v1117, %v1116
    %1134 = vmatprep.subr.bf16.mxu0 0
    %1135 = vmatpush1.bf16.msra.mxu0 %v1118
    %1136 = vmatprep.subr.bf16.mxu0 0
    %1137 = vmatpush1.bf16.msra.mxu0 %v1119
    %1138 = vmatprep.subr.bf16.mxu0 0
    %1139 = vmatpush1.bf16.msra.mxu0 %v1120
    %1140 = vmatprep.subr.bf16.mxu0 0
    %1141 = vmatpush1.bf16.msra.mxu0 %v1121
    %1142 = vmatprep.subr.bf16.mxu0 0
    %1143 = vmatpush1.bf16.msra.mxu0 %v1122
    %1144 = vmatprep.subr.bf16.mxu0 0
    %1145 = vmatpush1.bf16.msra.mxu0 %v1123
    %1146 = vmatprep.subr.bf16.mxu0 0
    %1147 = vmatpush1.bf16.msra.mxu0 %v1124
    %1148 = vmatprep.subr.bf16.mxu0 0
    %1149 = vmatpush1.bf16.msra.mxu0 %v1125
    %1150 = vmatprep.subr.bf16.mxu0 0
    %1151 = vmatpush1.bf16.msra.mxu0 0
    %1152 = vmatprep.subr.bf16.mxu0 0
    %1153 = vmatpush1.bf16.msra.mxu0 0
    %1154 = vmatprep.subr.bf16.mxu0 0
    %1155 = vmatpush1.bf16.msra.mxu0 0
    %1156 = vmatprep.subr.bf16.mxu0 0
    %1157 = vmatpush1.bf16.msra.mxu0 0
    %1158 = vmatprep.subr.bf16.mxu0 0
    %1159 = vmatpush1.bf16.msra.mxu0 0
    %1160 = vmatprep.subr.bf16.mxu0 0
    %1161 = vmatpush1.bf16.msra.mxu0 0
    %1162 = vmatprep.subr.bf16.mxu0 0
    %1163 = vmatpush1.bf16.msra.mxu0 0
    %1164 = vmatprep.subr.bf16.mxu0 0
    %1165 = vmatpush1.bf16.msra.mxu0 0
    %1166 = vmatprep.mubr.bf16.mxu0 0
    %1167 = vmatmul.mubr.bf16.gmra.mrb[0].mxu0 %v1067
    %v1168 = vpop.f32.mrb[0].mxu0
    %v1169 = vadd.f32 %v1085, %v1168
    %v1170 = vpop.f32.mrb[0].mxu0
    %v1171 = vpop.f32.mrb[0].mxu0
    %v1172 = vpop.f32.mrb[0].mxu0
    %1173 = vdwg.mxu0
    %v1174 = vmax.f32 %v1169, 0.0
    %v1175 = vpack.c.bf16 %v1174, %v1174
    %v1176 = vld [vmem:[#allocation2 + $0x300] sm:$0xf]
    %v1177 = vld [vmem:[#allocation2 + $0x304] sm:$0xf]
    %v1178 = vld [vmem:[#allocation2 + $0x308] sm:$0xf]
    %v1179 = vld [vmem:[#allocation2 + $0x30c] sm:$0xf]
    %v1180 = vld [vmem:[#allocation2 + $0x310] sm:$0xf]
    %v1181 = vld [vmem:[#allocation2 + $0x314] sm:$0xf]
    %v1182 = vld [vmem:[#allocation2 + $0x318] sm:$0xf]
    %v1183 = vld [vmem:[#allocation2 + $0x31c] sm:$0xf]
    %v1184 = vld [vmem:[#allocation2 + $0x320] sm:$0xf]
    %v1185 = vld [vmem:[#allocation2 + $0x324] sm:$0xf]
    %v1186 = vld [vmem:[#allocation2 + $0x328] sm:$0xf]
    %v1187 = vld [vmem:[#allocation2 + $0x32c] sm:$0xf]
    %v1188 = vld [vmem:[#allocation2 + $0x330] sm:$0xf]
    %v1189 = vld [vmem:[#allocation2 + $0x334] sm:$0xf]
    %v1190 = vld [vmem:[#allocation2 + $0x338] sm:$0xf]
    %v1191 = vld [vmem:[#allocation2 + $0x33c] sm:$0xf]
    %s1192 = scalar_lea.vmem %s3, 40
    %v1193 = vld [vmem:[%s1192] sm:$0xff]
    %v1210 = vunpack.c.l.b16 %v1176
    %v1211 = vunpack.c.l.b16 %v1177
    %v1212 = vunpack.c.l.b16 %v1178
    %v1213 = vunpack.c.l.b16 %v1179
    %v1214 = vunpack.c.l.b16 %v1180
    %v1215 = vunpack.c.l.b16 %v1181
    %v1216 = vunpack.c.l.b16 %v1182
    %v1217 = vunpack.c.l.b16 %v1183
    %v1218 = vunpack.c.l.b16 %v1184
    %v1219 = vunpack.c.l.b16 %v1185
    %v1220 = vunpack.c.l.b16 %v1186
    %v1221 = vunpack.c.l.b16 %v1187
    %v1222 = vunpack.c.l.b16 %v1188
    %v1223 = vunpack.c.l.b16 %v1189
    %v1224 = vunpack.c.l.b16 %v1190
    %v1225 = vunpack.c.l.b16 %v1191
    %v1226 = vpack.c.b16 %v1211, %v1210
    %v1227 = vpack.c.b16 %v1213, %v1212
    %v1228 = vpack.c.b16 %v1215, %v1214
    %v1229 = vpack.c.b16 %v1217, %v1216
    %v1230 = vpack.c.b16 %v1219, %v1218
    %v1231 = vpack.c.b16 %v1221, %v1220
    %v1232 = vpack.c.b16 %v1223, %v1222
    %v1233 = vpack.c.b16 %v1225, %v1224
    %1242 = vmatprep.subr.bf16.mxu0 0
    %1243 = vmatpush1.bf16.msra.mxu0 %v1226
    %1244 = vmatprep.subr.bf16.mxu0 0
    %1245 = vmatpush1.bf16.msra.mxu0 %v1227
    %1246 = vmatprep.subr.bf16.mxu0 0
    %1247 = vmatpush1.bf16.msra.mxu0 %v1228
    %1248 = vmatprep.subr.bf16.mxu0 0
    %1249 = vmatpush1.bf16.msra.mxu0 %v1229
    %1250 = vmatprep.subr.bf16.mxu0 0
    %1251 = vmatpush1.bf16.msra.mxu0 %v1230
    %1252 = vmatprep.subr.bf16.mxu0 0
    %1253 = vmatpush1.bf16.msra.mxu0 %v1231
    %1254 = vmatprep.subr.bf16.mxu0 0
    %1255 = vmatpush1.bf16.msra.mxu0 %v1232
    %1256 = vmatprep.subr.bf16.mxu0 0
    %1257 = vmatpush1.bf16.msra.mxu0 %v1233
    %1258 = vmatprep.subr.bf16.mxu0 0
    %1259 = vmatpush1.bf16.msra.mxu0 0
    %1260 = vmatprep.subr.bf16.mxu0 0
    %1261 = vmatpush1.bf16.msra.mxu0 0
    %1262 = vmatprep.subr.bf16.mxu0 0
    %1263 = vmatpush1.bf16.msra.mxu0 0
    %1264 = vmatprep.subr.bf16.mxu0 0
    %1265 = vmatpush1.bf16.msra.mxu0 0
    %1266 = vmatprep.subr.bf16.mxu0 0
    %1267 = vmatpush1.bf16.msra.mxu0 0
    %1268 = vmatprep.subr.bf16.mxu0 0
    %1269 = vmatpush1.bf16.msra.mxu0 0
    %1270 = vmatprep.subr.bf16.mxu0 0
    %1271 = vmatpush1.bf16.msra.mxu0 0
    %1272 = vmatprep.subr.bf16.mxu0 0
    %1273 = vmatpush1.bf16.msra.mxu0 0
    %1274 = vmatprep.mubr.bf16.mxu0 0
    %1275 = vmatmul.mubr.bf16.gmra.mrb[0].mxu0 %v1175
    %v1276 = vpop.f32.mrb[0].mxu0
    %v1277 = vadd.f32 %v1193, %v1276
    %v1278 = vpop.f32.mrb[0].mxu0
    %v1279 = vpop.f32.mrb[0].mxu0
    %v1280 = vpop.f32.mrb[0].mxu0
    %1281 = vdwg.mxu0
    %v1282 = vmax.f32 %v1277, 0.0
    %v1283 = vpack.c.bf16 %v1282, %v1282
    %v1284 = vld [vmem:[#allocation2 + $0x340] sm:$0xf]
    %v1285 = vld [vmem:[#allocation2 + $0x344] sm:$0xf]
    %v1286 = vld [vmem:[#allocation2 + $0x348] sm:$0xf]
    %v1287 = vld [vmem:[#allocation2 + $0x34c] sm:$0xf]
    %v1288 = vld [vmem:[#allocation2 + $0x350] sm:$0xf]
    %v1289 = vld [vmem:[#allocation2 + $0x354] sm:$0xf]
    %v1290 = vld [vmem:[#allocation2 + $0x358] sm:$0xf]
    %v1291 = vld [vmem:[#allocation2 + $0x35c] sm:$0xf]
    %v1292 = vld [vmem:[#allocation2 + $0x360] sm:$0xf]
    %v1293 = vld [vmem:[#allocation2 + $0x364] sm:$0xf]
    %v1294 = vld [vmem:[#allocation2 + $0x368] sm:$0xf]
    %v1295 = vld [vmem:[#allocation2 + $0x36c] sm:$0xf]
    %v1296 = vld [vmem:[#allocation2 + $0x370] sm:$0xf]
    %v1297 = vld [vmem:[#allocation2 + $0x374] sm:$0xf]
    %v1298 = vld [vmem:[#allocation2 + $0x378] sm:$0xf]
    %v1299 = vld [vmem:[#allocation2 + $0x37c] sm:$0xf]
    %v1300 = vld [vmem:[#allocation2 + $0x380] sm:$0xf]
    %v1301 = vld [vmem:[#allocation2 + $0x384] sm:$0xf]
    %v1302 = vld [vmem:[#allocation2 + $0x388] sm:$0xf]
    %v1303 = vld [vmem:[#allocation2 + $0x38c] sm:$0xf]
    %v1304 = vld [vmem:[#allocation2 + $0x390] sm:$0xf]
    %v1305 = vld [vmem:[#allocation2 + $0x394] sm:$0xf]
    %v1306 = vld [vmem:[#allocation2 + $0x398] sm:$0xf]
    %v1307 = vld [vmem:[#allocation2 + $0x39c] sm:$0xf]
    %v1308 = vld [vmem:[#allocation2 + $0x3a0] sm:$0xf]
    %v1309 = vld [vmem:[#allocation2 + $0x3a4] sm:$0xf]
    %v1310 = vld [vmem:[#allocation2 + $0x3a8] sm:$0xf]
    %v1311 = vld [vmem:[#allocation2 + $0x3ac] sm:$0xf]
    %v1312 = vld [vmem:[#allocation2 + $0x3b0] sm:$0xf]
    %v1313 = vld [vmem:[#allocation2 + $0x3b4] sm:$0xf]
    %v1314 = vld [vmem:[#allocation2 + $0x3b8] sm:$0xf]
    %v1315 = vld [vmem:[#allocation2 + $0x3bc] sm:$0xf]
    %s1316 = scalar_lea.vmem %s3, 48
    %v1317 = vld [vmem:[%s1316] sm:$0xff]
    %v1350 = vunpack.c.l.b16 %v1284
    %v1351 = vunpack.c.l.b16 %v1285
    %v1352 = vunpack.c.l.b16 %v1286
    %v1353 = vunpack.c.l.b16 %v1287
    %v1354 = vunpack.c.l.b16 %v1288
    %v1355 = vunpack.c.l.b16 %v1289
    %v1356 = vunpack.c.l.b16 %v1290
    %v1357 = vunpack.c.l.b16 %v1291
    %v1358 = vunpack.c.l.b16 %v1292
    %v1359 = vunpack.c.l.b16 %v1293
    %v1360 = vunpack.c.l.b16 %v1294
    %v1361 = vunpack.c.l.b16 %v1295
    %v1362 = vunpack.c.l.b16 %v1296
    %v1363 = vunpack.c.l.b16 %v1297
    %v1364 = vunpack.c.l.b16 %v1298
    %v1365 = vunpack.c.l.b16 %v1299
    %v1366 = vunpack.c.l.b16 %v1300
    %v1367 = vunpack.c.l.b16 %v1301
    %v1368 = vunpack.c.l.b16 %v1302
    %v1369 = vunpack.c.l.b16 %v1303
    %v1370 = vunpack.c.l.b16 %v1304
    %v1371 = vunpack.c.l.b16 %v1305
    %v1372 = vunpack.c.l.b16 %v1306
    %v1373 = vunpack.c.l.b16 %v1307
    %v1374 = vunpack.c.l.b16 %v1308
    %v1375 = vunpack.c.l.b16 %v1309
    %v1376 = vunpack.c.l.b16 %v1310
    %v1377 = vunpack.c.l.b16 %v1311
    %v1378 = vunpack.c.l.b16 %v1312
    %v1379 = vunpack.c.l.b16 %v1313
    %v1380 = vunpack.c.l.b16 %v1314
    %v1381 = vunpack.c.l.b16 %v1315
    %v1382 = vpack.c.b16 %v1351, %v1350
    %v1383 = vpack.c.b16 %v1353, %v1352
    %v1384 = vpack.c.b16 %v1355, %v1354
    %v1385 = vpack.c.b16 %v1357, %v1356
    %v1386 = vpack.c.b16 %v1359, %v1358
    %v1387 = vpack.c.b16 %v1361, %v1360
    %v1388 = vpack.c.b16 %v1363, %v1362
    %v1389 = vpack.c.b16 %v1365, %v1364
    %v1390 = vpack.c.b16 %v1367, %v1366
    %v1391 = vpack.c.b16 %v1369, %v1368
    %v1392 = vpack.c.b16 %v1371, %v1370
    %v1393 = vpack.c.b16 %v1373, %v1372
    %v1394 = vpack.c.b16 %v1375, %v1374
    %v1395 = vpack.c.b16 %v1377, %v1376
    %v1396 = vpack.c.b16 %v1379, %v1378
    %v1397 = vpack.c.b16 %v1381, %v1380
    %1414 = vmatprep.subr.bf16.mxu0 0
    %1415 = vmatpush1.bf16.msra.mxu0 %v1382
    %1416 = vmatprep.subr.bf16.mxu0 0
    %1417 = vmatpush1.bf16.msra.mxu0 %v1383
    %1418 = vmatprep.subr.bf16.mxu0 0
    %1419 = vmatpush1.bf16.msra.mxu0 %v1384
    %1420 = vmatprep.subr.bf16.mxu0 0
    %1421 = vmatpush1.bf16.msra.mxu0 %v1385
    %1422 = vmatprep.subr.bf16.mxu0 0
    %1423 = vmatpush1.bf16.msra.mxu0 %v1386
    %1424 = vmatprep.subr.bf16.mxu0 0
    %1425 = vmatpush1.bf16.msra.mxu0 %v1387
    %1426 = vmatprep.subr.bf16.mxu0 0
    %1427 = vmatpush1.bf16.msra.mxu0 %v1388
    %1428 = vmatprep.subr.bf16.mxu0 0
    %1429 = vmatpush1.bf16.msra.mxu0 %v1389
    %1430 = vmatprep.subr.bf16.mxu0 0
    %1431 = vmatpush1.bf16.msra.mxu0 %v1390
    %1432 = vmatprep.subr.bf16.mxu0 0
    %1433 = vmatpush1.bf16.msra.mxu0 %v1391
    %1434 = vmatprep.subr.bf16.mxu0 0
    %1435 = vmatpush1.bf16.msra.mxu0 %v1392
    %1436 = vmatprep.subr.bf16.mxu0 0
    %1437 = vmatpush1.bf16.msra.mxu0 %v1393
    %1438 = vmatprep.subr.bf16.mxu0 0
    %1439 = vmatpush1.bf16.msra.mxu0 %v1394
    %1440 = vmatprep.subr.bf16.mxu0 0
    %1441 = vmatpush1.bf16.msra.mxu0 %v1395
    %1442 = vmatprep.subr.bf16.mxu0 0
    %1443 = vmatpush1.bf16.msra.mxu0 %v1396
    %1444 = vmatprep.subr.bf16.mxu0 0
    %1445 = vmatpush1.bf16.msra.mxu0 %v1397
    %1446 = vmatprep.mubr.bf16.mxu0 %v1283
    %1447 = vmatmul.mubr.bf16.gmra.mrb[0].mxu0 %v780
    %v1448 = vpop.f32.mrb[0].mxu0
    %v1449 = vadd.f32 %v1317, %v1448
    %v1450 = vpop.f32.mrb[0].mxu0
    %v1451 = vpop.f32.mrb[0].mxu0
    %v1452 = vpop.f32.mrb[0].mxu0
    %1453 = vdwg.mxu0
    %v1454 = vmax.f32 %v1449, 0.0
    %v1455 = vpack.c.bf16 %v1454, %v1454
    %v1456 = vld [vmem:[#allocation2 + $0x3c0] sm:$0xf]
    %v1457 = vld [vmem:[#allocation2 + $0x3c4] sm:$0xf]
    %v1458 = vld [vmem:[#allocation2 + $0x3c8] sm:$0xf]
    %v1459 = vld [vmem:[#allocation2 + $0x3cc] sm:$0xf]
    %v1460 = vld [vmem:[#allocation2 + $0x3d0] sm:$0xf]
    %v1461 = vld [vmem:[#allocation2 + $0x3d4] sm:$0xf]
    %v1462 = vld [vmem:[#allocation2 + $0x3d8] sm:$0xf]
    %v1463 = vld [vmem:[#allocation2 + $0x3dc] sm:$0xf]
    %v1464 = vld [vmem:[#allocation2 + $0x3e0] sm:$0xf]
    %v1465 = vld [vmem:[#allocation2 + $0x3e4] sm:$0xf]
    %v1466 = vld [vmem:[#allocation2 + $0x3e8] sm:$0xf]
    %v1467 = vld [vmem:[#allocation2 + $0x3ec] sm:$0xf]
    %v1468 = vld [vmem:[#allocation2 + $0x3f0] sm:$0xf]
    %v1469 = vld [vmem:[#allocation2 + $0x3f4] sm:$0xf]
    %v1470 = vld [vmem:[#allocation2 + $0x3f8] sm:$0xf]
    %v1471 = vld [vmem:[#allocation2 + $0x3fc] sm:$0xf]
    %s1472 = scalar_lea.vmem %s3, 56
    %v1473 = vld [vmem:[%s1472] sm:$0xff]
    %v1490 = vunpack.c.l.b16 %v1456
    %v1491 = vunpack.c.l.b16 %v1457
    %v1492 = vunpack.c.l.b16 %v1458
    %v1493 = vunpack.c.l.b16 %v1459
    %v1494 = vunpack.c.l.b16 %v1460
    %v1495 = vunpack.c.l.b16 %v1461
    %v1496 = vunpack.c.l.b16 %v1462
    %v1497 = vunpack.c.l.b16 %v1463
    %v1498 = vunpack.c.l.b16 %v1464
    %v1499 = vunpack.c.l.b16 %v1465
    %v1500 = vunpack.c.l.b16 %v1466
    %v1501 = vunpack.c.l.b16 %v1467
    %v1502 = vunpack.c.l.b16 %v1468
    %v1503 = vunpack.c.l.b16 %v1469
    %v1504 = vunpack.c.l.b16 %v1470
    %v1505 = vunpack.c.l.b16 %v1471
    %v1506 = vpack.c.b16 %v1491, %v1490
    %v1507 = vpack.c.b16 %v1493, %v1492
    %v1508 = vpack.c.b16 %v1495, %v1494
    %v1509 = vpack.c.b16 %v1497, %v1496
    %v1510 = vpack.c.b16 %v1499, %v1498
    %v1511 = vpack.c.b16 %v1501, %v1500
    %v1512 = vpack.c.b16 %v1503, %v1502
    %v1513 = vpack.c.b16 %v1505, %v1504
    %1522 = vmatprep.subr.bf16.mxu0 0
    %1523 = vmatpush1.bf16.msra.mxu0 %v1506
    %1524 = vmatprep.subr.bf16.mxu0 0
    %1525 = vmatpush1.bf16.msra.mxu0 %v1507
    %1526 = vmatprep.subr.bf16.mxu0 0
    %1527 = vmatpush1.bf16.msra.mxu0 %v1508
    %1528 = vmatprep.subr.bf16.mxu0 0
    %1529 = vmatpush1.bf16.msra.mxu0 %v1509
    %1530 = vmatprep.subr.bf16.mxu0 0
    %1531 = vmatpush1.bf16.msra.mxu0 %v1510
    %1532 = vmatprep.subr.bf16.mxu0 0
    %1533 = vmatpush1.bf16.msra.mxu0 %v1511
    %1534 = vmatprep.subr.bf16.mxu0 0
    %1535 = vmatpush1.bf16.msra.mxu0 %v1512
    %1536 = vmatprep.subr.bf16.mxu0 0
    %1537 = vmatpush1.bf16.msra.mxu0 %v1513
    %1538 = vmatprep.subr.bf16.mxu0 0
    %1539 = vmatpush1.bf16.msra.mxu0 0
    %1540 = vmatprep.subr.bf16.mxu0 0
    %1541 = vmatpush1.bf16.msra.mxu0 0
    %1542 = vmatprep.subr.bf16.mxu0 0
    %1543 = vmatpush1.bf16.msra.mxu0 0
    %1544 = vmatprep.subr.bf16.mxu0 0
    %1545 = vmatpush1.bf16.msra.mxu0 0
    %1546 = vmatprep.subr.bf16.mxu0 0
    %1547 = vmatpush1.bf16.msra.mxu0 0
    %1548 = vmatprep.subr.bf16.mxu0 0
    %1549 = vmatpush1.bf16.msra.mxu0 0
    %1550 = vmatprep.subr.bf16.mxu0 0
    %1551 = vmatpush1.bf16.msra.mxu0 0
    %1552 = vmatprep.subr.bf16.mxu0 0
    %1553 = vmatpush1.bf16.msra.mxu0 0
    %1554 = vmatprep.mubr.bf16.mxu0 0
    %1555 = vmatmul.mubr.bf16.gmra.mrb[0].mxu0 %v1455
    %v1556 = vpop.f32.mrb[0].mxu0
    %v1557 = vadd.f32 %v1473, %v1556
    %v1558 = vpop.f32.mrb[0].mxu0
    %v1559 = vpop.f32.mrb[0].mxu0
    %v1560 = vpop.f32.mrb[0].mxu0
    %1561 = vdwg.mxu0
    %v1562 = vpack.c.bf16 %v1557, %v1557
    %v1563 = vld [vmem:[#allocation2 + $0x400] sm:$0xf]
    %v1564 = vld [vmem:[#allocation2 + $0x404] sm:$0xf]
    %v1565 = vld [vmem:[#allocation2 + $0x408] sm:$0xf]
    %v1566 = vld [vmem:[#allocation2 + $0x40c] sm:$0xf]
    %v1567 = vld [vmem:[#allocation2 + $0x410] sm:$0xf]
    %v1568 = vld [vmem:[#allocation2 + $0x414] sm:$0xf]
    %v1569 = vld [vmem:[#allocation2 + $0x418] sm:$0xf]
    %v1570 = vld [vmem:[#allocation2 + $0x41c] sm:$0xf]
    %v1571 = vld [vmem:[#allocation2 + $0x420] sm:$0xf]
    %v1572 = vld [vmem:[#allocation2 + $0x424] sm:$0xf]
    %v1573 = vld [vmem:[#allocation2 + $0x428] sm:$0xf]
    %v1574 = vld [vmem:[#allocation2 + $0x42c] sm:$0xf]
    %v1575 = vld [vmem:[#allocation2 + $0x430] sm:$0xf]
    %v1576 = vld [vmem:[#allocation2 + $0x434] sm:$0xf]
    %v1577 = vld [vmem:[#allocation2 + $0x438] sm:$0xf]
    %v1578 = vld [vmem:[#allocation2 + $0x43c] sm:$0xf]
    %v1579 = vld [vmem:[#allocation2 + $0x440] sm:$0xf]
    %v1580 = vld [vmem:[#allocation2 + $0x444] sm:$0xf]
    %v1581 = vld [vmem:[#allocation2 + $0x448] sm:$0xf]
    %v1582 = vld [vmem:[#allocation2 + $0x44c] sm:$0xf]
    %v1583 = vld [vmem:[#allocation2 + $0x450] sm:$0xf]
    %v1584 = vld [vmem:[#allocation2 + $0x454] sm:$0xf]
    %v1585 = vld [vmem:[#allocation2 + $0x458] sm:$0xf]
    %v1586 = vld [vmem:[#allocation2 + $0x45c] sm:$0xf]
    %v1587 = vld [vmem:[#allocation2 + $0x460] sm:$0xf]
    %v1588 = vld [vmem:[#allocation2 + $0x464] sm:$0xf]
    %v1589 = vld [vmem:[#allocation2 + $0x468] sm:$0xf]
    %v1590 = vld [vmem:[#allocation2 + $0x46c] sm:$0xf]
    %v1591 = vld [vmem:[#allocation2 + $0x470] sm:$0xf]
    %v1592 = vld [vmem:[#allocation2 + $0x474] sm:$0xf]
    %v1593 = vld [vmem:[#allocation2 + $0x478] sm:$0xf]
    %v1594 = vld [vmem:[#allocation2 + $0x47c] sm:$0xf]
    %s1595 = scalar_lea.vmem %s3, 64
    %v1596 = vld [vmem:[%s1595] sm:$0xff]
    %v1629 = vunpack.c.l.b16 %v1563
    %v1630 = vunpack.c.l.b16 %v1564
    %v1631 = vunpack.c.l.b16 %v1565
    %v1632 = vunpack.c.l.b16 %v1566
    %v1633 = vunpack.c.l.b16 %v1567
    %v1634 = vunpack.c.l.b16 %v1568
    %v1635 = vunpack.c.l.b16 %v1569
    %v1636 = vunpack.c.l.b16 %v1570
    %v1637 = vunpack.c.l.b16 %v1571
    %v1638 = vunpack.c.l.b16 %v1572
    %v1639 = vunpack.c.l.b16 %v1573
    %v1640 = vunpack.c.l.b16 %v1574
    %v1641 = vunpack.c.l.b16 %v1575
    %v1642 = vunpack.c.l.b16 %v1576
    %v1643 = vunpack.c.l.b16 %v1577
    %v1644 = vunpack.c.l.b16 %v1578
    %v1645 = vunpack.c.l.b16 %v1579
    %v1646 = vunpack.c.l.b16 %v1580
    %v1647 = vunpack.c.l.b16 %v1581
    %v1648 = vunpack.c.l.b16 %v1582
    %v1649 = vunpack.c.l.b16 %v1583
    %v1650 = vunpack.c.l.b16 %v1584
    %v1651 = vunpack.c.l.b16 %v1585
    %v1652 = vunpack.c.l.b16 %v1586
    %v1653 = vunpack.c.l.b16 %v1587
    %v1654 = vunpack.c.l.b16 %v1588
    %v1655 = vunpack.c.l.b16 %v1589
    %v1656 = vunpack.c.l.b16 %v1590
    %v1657 = vunpack.c.l.b16 %v1591
    %v1658 = vunpack.c.l.b16 %v1592
    %v1659 = vunpack.c.l.b16 %v1593
    %v1660 = vunpack.c.l.b16 %v1594
    %v1661 = vpack.c.b16 %v1630, %v1629
    %v1662 = vpack.c.b16 %v1632, %v1631
    %v1663 = vpack.c.b16 %v1634, %v1633
    %v1664 = vpack.c.b16 %v1636, %v1635
    %v1665 = vpack.c.b16 %v1638, %v1637
    %v1666 = vpack.c.b16 %v1640, %v1639
    %v1667 = vpack.c.b16 %v1642, %v1641
    %v1668 = vpack.c.b16 %v1644, %v1643
    %v1669 = vpack.c.b16 %v1646, %v1645
    %v1670 = vpack.c.b16 %v1648, %v1647
    %v1671 = vpack.c.b16 %v1650, %v1649
    %v1672 = vpack.c.b16 %v1652, %v1651
    %v1673 = vpack.c.b16 %v1654, %v1653
    %v1674 = vpack.c.b16 %v1656, %v1655
    %v1675 = vpack.c.b16 %v1658, %v1657
    %v1676 = vpack.c.b16 %v1660, %v1659
    %1693 = vmatprep.subr.bf16.mxu0 0
    %1694 = vmatpush1.bf16.msra.mxu0 %v1661
    %1695 = vmatprep.subr.bf16.mxu0 0
    %1696 = vmatpush1.bf16.msra.mxu0 %v1662
    %1697 = vmatprep.subr.bf16.mxu0 0
    %1698 = vmatpush1.bf16.msra.mxu0 %v1663
    %1699 = vmatprep.subr.bf16.mxu0 0
    %1700 = vmatpush1.bf16.msra.mxu0 %v1664
    %1701 = vmatprep.subr.bf16.mxu0 0
    %1702 = vmatpush1.bf16.msra.mxu0 %v1665
    %1703 = vmatprep.subr.bf16.mxu0 0
    %1704 = vmatpush1.bf16.msra.mxu0 %v1666
    %1705 = vmatprep.subr.bf16.mxu0 0
    %1706 = vmatpush1.bf16.msra.mxu0 %v1667
    %1707 = vmatprep.subr.bf16.mxu0 0
    %1708 = vmatpush1.bf16.msra.mxu0 %v1668
    %1709 = vmatprep.subr.bf16.mxu0 0
    %1710 = vmatpush1.bf16.msra.mxu0 %v1669
    %1711 = vmatprep.subr.bf16.mxu0 0
    %1712 = vmatpush1.bf16.msra.mxu0 %v1670
    %1713 = vmatprep.subr.bf16.mxu0 0
    %1714 = vmatpush1.bf16.msra.mxu0 %v1671
    %1715 = vmatprep.subr.bf16.mxu0 0
    %1716 = vmatpush1.bf16.msra.mxu0 %v1672
    %1717 = vmatprep.subr.bf16.mxu0 0
    %1718 = vmatpush1.bf16.msra.mxu0 %v1673
    %1719 = vmatprep.subr.bf16.mxu0 0
    %1720 = vmatpush1.bf16.msra.mxu0 %v1674
    %1721 = vmatprep.subr.bf16.mxu0 0
    %1722 = vmatpush1.bf16.msra.mxu0 %v1675
    %1723 = vmatprep.subr.bf16.mxu0 0
    %1724 = vmatpush1.bf16.msra.mxu0 %v1676
    %1725 = vmatprep.mubr.bf16.mxu0 %v1562
    %1726 = vmatmul.mubr.bf16.gmra.mrb[0].mxu0 %v1283
    %v1727 = vpop.f32.mrb[0].mxu0
    %v1728 = vadd.f32 %v1596, %v1727
    %v1729 = vpop.f32.mrb[0].mxu0
    %v1730 = vpop.f32.mrb[0].mxu0
    %v1731 = vpop.f32.mrb[0].mxu0
    %1732 = vdwg.mxu0
    %v1733 = vmax.f32 %v1728, 0.0
    %v1734 = vpack.c.bf16 %v1733, %v1733
    %v1735 = vld [vmem:[#allocation2 + $0x480] sm:$0xf]
    %v1736 = vld [vmem:[#allocation2 + $0x484] sm:$0xf]
    %v1737 = vld [vmem:[#allocation2 + $0x488] sm:$0xf]
    %v1738 = vld [vmem:[#allocation2 + $0x48c] sm:$0xf]
    %v1739 = vld [vmem:[#allocation2 + $0x490] sm:$0xf]
    %v1740 = vld [vmem:[#allocation2 + $0x494] sm:$0xf]
    %v1741 = vld [vmem:[#allocation2 + $0x498] sm:$0xf]
    %v1742 = vld [vmem:[#allocation2 + $0x49c] sm:$0xf]
    %v1743 = vld [vmem:[#allocation2 + $0x4a0] sm:$0xf]
    %v1744 = vld [vmem:[#allocation2 + $0x4a4] sm:$0xf]
    %v1745 = vld [vmem:[#allocation2 + $0x4a8] sm:$0xf]
    %v1746 = vld [vmem:[#allocation2 + $0x4ac] sm:$0xf]
    %v1747 = vld [vmem:[#allocation2 + $0x4b0] sm:$0xf]
    %v1748 = vld [vmem:[#allocation2 + $0x4b4] sm:$0xf]
    %v1749 = vld [vmem:[#allocation2 + $0x4b8] sm:$0xf]
    %v1750 = vld [vmem:[#allocation2 + $0x4bc] sm:$0xf]
    %s1751 = scalar_lea.vmem %s3, 72
    %v1752 = vld [vmem:[%s1751] sm:$0xff]
    %v1769 = vunpack.c.l.b16 %v1735
    %v1770 = vunpack.c.l.b16 %v1736
    %v1771 = vunpack.c.l.b16 %v1737
    %v1772 = vunpack.c.l.b16 %v1738
    %v1773 = vunpack.c.l.b16 %v1739
    %v1774 = vunpack.c.l.b16 %v1740
    %v1775 = vunpack.c.l.b16 %v1741
    %v1776 = vunpack.c.l.b16 %v1742
    %v1777 = vunpack.c.l.b16 %v1743
    %v1778 = vunpack.c.l.b16 %v1744
    %v1779 = vunpack.c.l.b16 %v1745
    %v1780 = vunpack.c.l.b16 %v1746
    %v1781 = vunpack.c.l.b16 %v1747
    %v1782 = vunpack.c.l.b16 %v1748
    %v1783 = vunpack.c.l.b16 %v1749
    %v1784 = vunpack.c.l.b16 %v1750
    %v1785 = vpack.c.b16 %v1770, %v1769
    %v1786 = vpack.c.b16 %v1772, %v1771
    %v1787 = vpack.c.b16 %v1774, %v1773
    %v1788 = vpack.c.b16 %v1776, %v1775
    %v1789 = vpack.c.b16 %v1778, %v1777
    %v1790 = vpack.c.b16 %v1780, %v1779
    %v1791 = vpack.c.b16 %v1782, %v1781
    %v1792 = vpack.c.b16 %v1784, %v1783
    %1801 = vmatprep.subr.bf16.mxu0 0
    %1802 = vmatpush1.bf16.msra.mxu0 %v1785
    %1803 = vmatprep.subr.bf16.mxu0 0
    %1804 = vmatpush1.bf16.msra.mxu0 %v1786
    %1805 = vmatprep.subr.bf16.mxu0 0
    %1806 = vmatpush1.bf16.msra.mxu0 %v1787
    %1807 = vmatprep.subr.bf16.mxu0 0
    %1808 = vmatpush1.bf16.msra.mxu0 %v1788
    %1809 = vmatprep.subr.bf16.mxu0 0
    %1810 = vmatpush1.bf16.msra.mxu0 %v1789
    %1811 = vmatprep.subr.bf16.mxu0 0
    %1812 = vmatpush1.bf16.msra.mxu0 %v1790
    %1813 = vmatprep.subr.bf16.mxu0 0
    %1814 = vmatpush1.bf16.msra.mxu0 %v1791
    %1815 = vmatprep.subr.bf16.mxu0 0
    %1816 = vmatpush1.bf16.msra.mxu0 %v1792
    %1817 = vmatprep.subr.bf16.mxu0 0
    %1818 = vmatpush1.bf16.msra.mxu0 0
    %1819 = vmatprep.subr.bf16.mxu0 0
    %1820 = vmatpush1.bf16.msra.mxu0 0
    %1821 = vmatprep.subr.bf16.mxu0 0
    %1822 = vmatpush1.bf16.msra.mxu0 0
    %1823 = vmatprep.subr.bf16.mxu0 0
    %1824 = vmatpush1.bf16.msra.mxu0 0
    %1825 = vmatprep.subr.bf16.mxu0 0
    %1826 = vmatpush1.bf16.msra.mxu0 0
    %1827 = vmatprep.subr.bf16.mxu0 0
    %1828 = vmatpush1.bf16.msra.mxu0 0
    %1829 = vmatprep.subr.bf16.mxu0 0
    %1830 = vmatpush1.bf16.msra.mxu0 0
    %1831 = vmatprep.subr.bf16.mxu0 0
    %1832 = vmatpush1.bf16.msra.mxu0 0
    %1833 = vmatprep.mubr.bf16.mxu0 0
    %1834 = vmatmul.mubr.bf16.gmra.mrb[0].mxu0 %v1734
    %v1835 = vpop.f32.mrb[0].mxu0
    %v1836 = vadd.f32 %v1752, %v1835
    %v1837 = vpop.f32.mrb[0].mxu0
    %v1838 = vpop.f32.mrb[0].mxu0
    %v1839 = vpop.f32.mrb[0].mxu0
    %1840 = vdwg.mxu0
    %v1841 = vadd.f32 %v1557, %v1836
    %1842 = vst [vmem:[%s4] sm:$0xff] %v1841
    // Predicated region
    $region22: #{model_forward.1} parent=1 // pred_check
      _
    $region23: #{model_forward.1} parent=1 // pred_check_branch
      %1844 = sbr.rel (0) target = $region25
    $region24: #{model_forward.1} parent=1 // pred_region
      _
    $region25: #{model_forward.1} parent=1 // pred_fallthru
      _
    // Predicated region
    $region26: #{model_forward.1} parent=1 // pred_check
      _
    $region27: #{model_forward.1} parent=1 // pred_check_branch
      %1846 = sbr.rel (0) target = $region29
    $region28: #{model_forward.1} parent=1 // pred_region
      _
    $region29: #{model_forward.1} parent=1 // pred_fallthru
      _
    %1847 = vsyncpa [#allocation3], 1

</llo_original>
